<compile_context>
chip_gen: v6e
topology: v6e:2x2x1
jax: 0.10.0
libtpu: 0.0.40
codegen_flags: <defaults>
</compile_context>

<pallas_src>
import functools

import jax
import jax.numpy as jnp
from jax import lax
from jax.experimental import pallas as pl
from jax.experimental.pallas import tpu as pltpu

BN_EPS = 1e-5
VMEM_LIMIT_BYTES = 32 * 1024 * 1024  # safe on v5e/v6e (128 MiB) and v7x (64 MiB)


# ---------------------------------------------------------------------------
# Pass 1: per-channel sufficient statistics of z = x @ w (bias-free).
# ---------------------------------------------------------------------------
def _bn_stats_kernel(x_ref, w_ref, sum_ref, sumsq_ref):
    """Accumulate sum(z) and sum(z*z) per output channel across M tiles.

    x_ref:     (tile_m, Cin)
    w_ref:     (Cin, Cout)      -- resident across the grid
    sum_ref:   (1, Cout)        -- resident accumulator (same block every step)
    sumsq_ref: (1, Cout)        -- resident accumulator
    """
    i = pl.program_id(0)

    @pl.when(i == 0)
    def _():
        sum_ref[...] = jnp.zeros_like(sum_ref)
        sumsq_ref[...] = jnp.zeros_like(sumsq_ref)

    z = jnp.dot(x_ref[...], w_ref[...], preferred_element_type=jnp.float32)
    # Per-channel (axis-0) reductions done on the MXU (ones-row matmul) instead
    # of the XLU -- the MXU is otherwise idle for these tiny K.
    ones = jnp.ones((1, z.shape[0]), jnp.float32)
    sum_ref[...] += jnp.dot(ones, z, preferred_element_type=jnp.float32)
    sumsq_ref[...] += jnp.dot(ones, z * z, preferred_element_type=jnp.float32)


def layer_stats(x2d, w, tile_m):
    m_pad, c_in = x2d.shape
    c_out = w.shape[1]
    grid = (m_pad // tile_m,)
    return pl.pallas_call(
        _bn_stats_kernel,
        out_shape=(
            jax.ShapeDtypeStruct((1, c_out), jnp.float32),
            jax.ShapeDtypeStruct((1, c_out), jnp.float32),
        ),
        grid_spec=pltpu.PrefetchScalarGridSpec(
            num_scalar_prefetch=0,
            grid=grid,
            in_specs=[
                pl.BlockSpec((tile_m, c_in), lambda i: (i, 0)),
                pl.BlockSpec((c_in, c_out), lambda i: (0, 0)),
            ],
            out_specs=(
                pl.BlockSpec((1, c_out), lambda i: (0, 0)),
                pl.BlockSpec((1, c_out), lambda i: (0, 0)),
            ),
        ),
        compiler_params=pltpu.CompilerParams(
            dimension_semantics=("arbitrary",),  # accumulator across M tiles
            vmem_limit_bytes=VMEM_LIMIT_BYTES,
        ),
    )(x2d, w)


# ---------------------------------------------------------------------------
# Pass 2: fused conv1x1 + BN-apply + ReLU with BN folded into the weight.
# ---------------------------------------------------------------------------
def _conv_bn_relu_kernel(x_ref, w_ref, shift_ref, o_ref, *,
                         rows_valid, tile_m, need_mask):
    """o = relu(x @ w_eff + shift); padded rows re-zeroed when present.

    x_ref:     (tile_m, Cin)
    w_ref:     (Cin, Cout)   -- BN scale already folded in
    shift_ref: (1, Cout)     -- beta - mean * scale
    o_ref:     (tile_m, Cout)
    """
    z = jnp.dot(x_ref[...], w_ref[...], preferred_element_type=jnp.float32)
    y = jnp.maximum(z + shift_ref[...], 0.0)
    if need_mask:
        row = pl.program_id(0) * tile_m + lax.broadcasted_iota(
            jnp.int32, y.shape, 0)
        y = jnp.where(row < rows_valid, y, 0.0)
    o_ref[...] = y.astype(o_ref.dtype)


def layer_apply(x2d, w_eff, shift, tile_m, rows_valid):
    m_pad, c_in = x2d.shape
    c_out = w_eff.shape[1]
    grid = (m_pad // tile_m,)
    kern = functools.partial(
        _conv_bn_relu_kernel,
        rows_valid=rows_valid,
        tile_m=tile_m,
        need_mask=(rows_valid != m_pad),
    )
    flops = 2 * m_pad * c_in * c_out + 2 * m_pad * c_out
    bytes_accessed = 4 * (m_pad * c_in + m_pad * c_out + c_in * c_out + c_out)
    return pl.pallas_call(
        kern,
        out_shape=jax.ShapeDtypeStruct((m_pad, c_out), jnp.float32),
        grid_spec=pltpu.PrefetchScalarGridSpec(
            num_scalar_prefetch=0,
            grid=grid,
            in_specs=[
                pl.BlockSpec((tile_m, c_in), lambda i: (i, 0)),
                pl.BlockSpec((c_in, c_out), lambda i: (0, 0)),
                pl.BlockSpec((1, c_out), lambda i: (0, 0)),
            ],
            out_specs=pl.BlockSpec((tile_m, c_out), lambda i: (i, 0)),
        ),
        compiler_params=pltpu.CompilerParams(
            dimension_semantics=("parallel",),  # independent M tiles -> 2 TCs on v7x
            vmem_limit_bytes=VMEM_LIMIT_BYTES,
        ),
        cost_estimate=pl.CostEstimate(
            flops=flops, transcendentals=0, bytes_accessed=bytes_accessed),
    )(x2d, w_eff, shift)


# ---------------------------------------------------------------------------
# Parameters & forward
# ---------------------------------------------------------------------------
def init_mlp_params(key, in_channels, out_channels):
    """Deterministic init matching nn.Conv2d(k=1) + nn.BatchNorm2d shapes.

    Conv weight is stored pre-transposed as (c_in, c_out).  The conv bias is
    kept for parity with nn.Conv2d but is a no-op under training-mode BN.
    """
    channels = [in_channels] + list(out_channels)
    params = []
    for i in range(1, len(channels)):
        c_in, c_out = channels[i - 1], channels[i]
        key, kw, kb, kg, kbeta = jax.random.split(key, 5)
        w = jax.random.normal(kw, (c_in, c_out), jnp.float32) * 0.1
        b = jax.random.normal(kb, (1, c_out), jnp.float32) * 0.1
        gamma = 1.0 + 0.1 * jax.random.normal(kg, (1, c_out), jnp.float32)
        beta = 0.1 * jax.random.normal(kbeta, (1, c_out), jnp.float32)
        params.append((w, b, gamma, beta))
    return params


@functools.partial(jax.jit, static_argnames=("tile_m",))
def mlp_forward(x_nchw, params, tile_m=256):
    """Full MLP forward. Input/output layout matches PyTorch: NCHW.

    tile_m: rows per grid step (multiple of 8).  256 is used for the small
    demo; for large M pick 1024-2048 (budget ~2 buffers x tile_m x (Cin+Cout)
    x 4B against the per-generation VMEM limit).
    """
    assert tile_m % 8 == 0
    n, c, h, w = x_nchw.shape
    m = n * h * w
    x2d = jnp.transpose(x_nchw, (0, 2, 3, 1)).reshape(m, c)

    m_pad = ((m + tile_m - 1) // tile_m) * tile_m
    if m_pad != m:
        # Zero rows contribute nothing to the (bias-free) statistics.
        x2d = jnp.pad(x2d, ((0, m_pad - m), (0, 0)))

    for (wgt, _bias, gamma, beta) in params:  # conv bias cancels under BN
        # Pass 1: global batch statistics of z = x @ w over all M rows.
        z_sum, z_sumsq = layer_stats(x2d, wgt, tile_m)
        mean = z_sum / m
        var = jnp.maximum(z_sumsq / m - mean * mean, 0.0)
        # Fold BN into the conv: y = relu((x @ w) * scale + shift)
        #                          = relu(x @ (w * scale) + shift)
        scale = gamma * lax.rsqrt(var + BN_EPS)                      # (1, Cout)
        w_eff = wgt * jnp.dot(jnp.ones((wgt.shape[0], 1), jnp.float32), scale,
                              precision=lax.Precision.HIGHEST) if False else wgt * scale
        shift = beta - mean * scale
        # Pass 2: fused conv+BN+ReLU, tiled & megacore-parallel over M.
        x2d = layer_apply(x2d, w_eff, shift, tile_m, m)

    c_out = x2d.shape[-1]
    out2d = x2d[:m]
    return jnp.transpose(out2d.reshape(n, h, w, c_out), (0, 3, 1, 2))


def mlp_forward_ref(x_nchw, params):
    """Pure-JAX reference mirroring the PyTorch math (incl. the conv bias)."""
    n, c, h, w = x_nchw.shape
    x2d = jnp.transpose(x_nchw, (0, 2, 3, 1)).reshape(n * h * w, c)
    for (wgt, b, gamma, beta) in params:
        z = x2d @ wgt + b
        mean = jnp.mean(z, axis=0, keepdims=True)
        var = jnp.mean((z - mean) ** 2, axis=0, keepdims=True)
        z = (z - mean) * lax.rsqrt(var + BN_EPS) * gamma + beta
        x2d = jnp.maximum(z, 0.0)
    c_out = x2d.shape[-1]
    return jnp.transpose(x2d.reshape(n, h, w, c_out), (0, 3, 1, 2))


if __name__ == "__main__":
    # Shapes implied by the module: NCHW input, in_channels=4,
    # out_channels=[32, 16], dropout=0 (no Dropout layers), activation=relu.
    key = jax.random.PRNGKey(0)
    k_x, k_p = jax.random.split(key)

    in_channels = 4
    out_channels = [32, 16]
    x = jax.random.normal(k_x, (2, in_channels, 16, 16), jnp.float32)
    params = init_mlp_params(k_p, in_channels, out_channels)

    out = mlp_forward(x, params)           # M = 512 -> 2 tiles of 256 rows
    out = jax.block_until_ready(out)

    ref = mlp_forward_ref(x, params)
    assert out.shape == (2, out_channels[-1], 16, 16)
    assert jnp.allclose(out, ref, atol=1e-3, rtol=1e-3), float(
        jnp.max(jnp.abs(out - ref)))

    # TODO(synk): PyTorch BatchNorm2d (training) also updates running_mean/var
    # buffers; this forward-only kernel normalizes with batch stats and does
    # not emit running statistics.
    print("KERNEL_OK")
</pallas_src>

<mosaic_0001>
module attributes {stable_mosaic.version = 11 : i64} {
  func.func @_bn_stats_kernel(%arg0: i32, %arg1: memref<256x4xf32, #tpu.memory_space<vmem>>, %arg2: memref<4x32xf32, #tpu.memory_space<vmem>>, %arg3: memref<1x32xf32, #tpu.memory_space<vmem>>, %arg4: memref<1x32xf32, #tpu.memory_space<vmem>>) attributes {dimension_semantics = [#tpu.dimension_semantics<arbitrary>], iteration_bounds = array<i64: 2>, scalar_prefetch = 0 : i64, scratch_operands = 0 : i64, tpu.core_type = #tpu.core_type<tc>, window_params = [{transform_indices = @transform_0, window_bounds = array<i64: 256, 4>}, {pipeline_mode = #tpu.pipeline_mode<synchronous>, transform_indices = @transform_1, window_bounds = array<i64: 4, 32>}, {pipeline_mode = #tpu.pipeline_mode<synchronous>, transform_indices = @transform_2, window_bounds = array<i64: 1, 32>}, {pipeline_mode = #tpu.pipeline_mode<synchronous>, transform_indices = @transform_3, window_bounds = array<i64: 1, 32>}]} {
    %c0_i32 = arith.constant 0 : i32
    %0 = arith.cmpi eq, %arg0, %c0_i32 : i32
    %1 = arith.extui %0 : i1 to i32
    %c0_i32_0 = arith.constant 0 : i32
    %2 = arith.cmpi ne, %1, %c0_i32_0 : i32
    scf.if %2 {
      %cst_15 = arith.constant 0.000000e+00 : f32
      %16 = vector.broadcast %cst_15 : f32 to vector<1x32xf32>
      %c0_16 = arith.constant 0 : index
      %c0_17 = arith.constant 0 : index
      %17 = vector.load %arg3[%c0_16, %c0_17] : memref<1x32xf32, #tpu.memory_space<vmem>>, vector<1x32xf32>
      tpu.vector_store %arg3[%c0_16, %c0_17], %16 {strides = array<i32>} : memref<1x32xf32, #tpu.memory_space<vmem>>, vector<1x32xf32>,
      %cst_18 = arith.constant 0.000000e+00 : f32
      %18 = vector.broadcast %cst_18 : f32 to vector<1x32xf32>
      %c0_19 = arith.constant 0 : index
      %c0_20 = arith.constant 0 : index
      %19 = vector.load %arg4[%c0_19, %c0_20] : memref<1x32xf32, #tpu.memory_space<vmem>>, vector<1x32xf32>
      tpu.vector_store %arg4[%c0_19, %c0_20], %18 {strides = array<i32>} : memref<1x32xf32, #tpu.memory_space<vmem>>, vector<1x32xf32>,
    } else {
    }
    %c0 = arith.constant 0 : index
    %c0_1 = arith.constant 0 : index
    %3 = vector.load %arg1[%c0, %c0_1] : memref<256x4xf32, #tpu.memory_space<vmem>>, vector<256x4xf32>
    %c0_2 = arith.constant 0 : index
    %c0_3 = arith.constant 0 : index
    %4 = vector.load %arg2[%c0_2, %c0_3] : memref<4x32xf32, #tpu.memory_space<vmem>>, vector<4x32xf32>
    %cst = arith.constant dense<0.000000e+00> : vector<256x32xf32>
    %5 = tpu.matmul %3, %4, %cst {dimension_numbers = #tpu.dot_dimension_numbers<[1], [0], [0], [1], [0, 0, 1, 1], [], []>} : vector<256x4xf32>, vector<4x32xf32>, vector<256x32xf32> -> vector<256x32xf32>
    %cst_4 = arith.constant 1.000000e+00 : f32
    %6 = vector.broadcast %cst_4 : f32 to vector<1x256xf32>
    %c0_5 = arith.constant 0 : index
    %c0_6 = arith.constant 0 : index
    %7 = vector.load %arg3[%c0_5, %c0_6] : memref<1x32xf32, #tpu.memory_space<vmem>>, vector<1x32xf32>
    %cst_7 = arith.constant dense<0.000000e+00> : vector<1x32xf32>
    %8 = tpu.matmul %6, %5, %cst_7 {dimension_numbers = #tpu.dot_dimension_numbers<[1], [0], [0], [1], [0, 0, 1, 1], [], []>} : vector<1x256xf32>, vector<256x32xf32>, vector<1x32xf32> -> vector<1x32xf32>
    %9 = arith.addf %7, %8 : vector<1x32xf32>
    %c0_8 = arith.constant 0 : index
    %c0_9 = arith.constant 0 : index
    %10 = vector.load %arg3[%c0_8, %c0_9] : memref<1x32xf32, #tpu.memory_space<vmem>>, vector<1x32xf32>
    tpu.vector_store %arg3[%c0_8, %c0_9], %9 {strides = array<i32>} : memref<1x32xf32, #tpu.memory_space<vmem>>, vector<1x32xf32>,
    %c0_10 = arith.constant 0 : index
    %c0_11 = arith.constant 0 : index
    %11 = vector.load %arg4[%c0_10, %c0_11] : memref<1x32xf32, #tpu.memory_space<vmem>>, vector<1x32xf32>
    %12 = arith.mulf %5, %5 : vector<256x32xf32>
    %cst_12 = arith.constant dense<0.000000e+00> : vector<1x32xf32>
    %13 = tpu.matmul %6, %12, %cst_12 {dimension_numbers = #tpu.dot_dimension_numbers<[1], [0], [0], [1], [0, 0, 1, 1], [], []>} : vector<1x256xf32>, vector<256x32xf32>, vector<1x32xf32> -> vector<1x32xf32>
    %14 = arith.addf %11, %13 : vector<1x32xf32>
    %c0_13 = arith.constant 0 : index
    %c0_14 = arith.constant 0 : index
    %15 = vector.load %arg4[%c0_13, %c0_14] : memref<1x32xf32, #tpu.memory_space<vmem>>, vector<1x32xf32>
    tpu.vector_store %arg4[%c0_13, %c0_14], %14 {strides = array<i32>} : memref<1x32xf32, #tpu.memory_space<vmem>>, vector<1x32xf32>,
    return
  }
  func.func @transform_0(%arg0: i32) -> (i32, i32) {
    %c0_i32 = arith.constant 0 : i32
    %c0_i32_0 = arith.constant 0 : i32
    return %arg0, %c0_i32 : i32, i32
  }
  func.func @transform_1(%arg0: i32) -> (i32, i32) {
    %c0_i32 = arith.constant 0 : i32
    %c0_i32_0 = arith.constant 0 : i32
    %c0_i32_1 = arith.constant 0 : i32
    return %c0_i32, %c0_i32_0 : i32, i32
  }
  func.func @transform_2(%arg0: i32) -> (i32, i32) {
    %c0_i32 = arith.constant 0 : i32
    %c0_i32_0 = arith.constant 0 : i32
    %c0_i32_1 = arith.constant 0 : i32
    return %c0_i32, %c0_i32_0 : i32, i32
  }
  func.func @transform_3(%arg0: i32) -> (i32, i32) {
    %c0_i32 = arith.constant 0 : i32
    %c0_i32_0 = arith.constant 0 : i32
    %c0_i32_1 = arith.constant 0 : i32
    return %c0_i32, %c0_i32_0 : i32, i32
  }
}

module attributes {stable_mosaic.version = 11 : i64} {
  func.func @_conv_bn_relu_kernel(%arg0: i32, %arg1: memref<256x4xf32, #tpu.memory_space<vmem>>, %arg2: memref<4x32xf32, #tpu.memory_space<vmem>>, %arg3: memref<1x32xf32, #tpu.memory_space<vmem>>, %arg4: memref<256x32xf32, #tpu.memory_space<vmem>>) attributes {dimension_semantics = [#tpu.dimension_semantics<parallel>], iteration_bounds = array<i64: 2>, scalar_prefetch = 0 : i64, scratch_operands = 0 : i64, tpu.core_type = #tpu.core_type<tc>, window_params = [{transform_indices = @transform_0, window_bounds = array<i64: 256, 4>}, {pipeline_mode = #tpu.pipeline_mode<synchronous>, transform_indices = @transform_1, window_bounds = array<i64: 4, 32>}, {pipeline_mode = #tpu.pipeline_mode<synchronous>, transform_indices = @transform_2, window_bounds = array<i64: 1, 32>}, {transform_indices = @transform_3, window_bounds = array<i64: 256, 32>}]} {
    %c0 = arith.constant 0 : index
    %c0_0 = arith.constant 0 : index
    %0 = vector.load %arg1[%c0, %c0_0] : memref<256x4xf32, #tpu.memory_space<vmem>>, vector<256x4xf32>
    %c0_1 = arith.constant 0 : index
    %c0_2 = arith.constant 0 : index
    %1 = vector.load %arg2[%c0_1, %c0_2] : memref<4x32xf32, #tpu.memory_space<vmem>>, vector<4x32xf32>
    %cst = arith.constant dense<0.000000e+00> : vector<256x32xf32>
    %2 = tpu.matmul %0, %1, %cst {dimension_numbers = #tpu.dot_dimension_numbers<[1], [0], [0], [1], [0, 0, 1, 1], [], []>} : vector<256x4xf32>, vector<4x32xf32>, vector<256x32xf32> -> vector<256x32xf32>
    %c0_3 = arith.constant 0 : index
    %c0_4 = arith.constant 0 : index
    %3 = vector.load %arg3[%c0_3, %c0_4] : memref<1x32xf32, #tpu.memory_space<vmem>>, vector<1x32xf32>
    %4 = vector.broadcast %3 : vector<1x32xf32> to vector<256x32xf32>
    %5 = arith.addf %2, %4 : vector<256x32xf32>
    %cst_5 = arith.constant 0.000000e+00 : f32
    %6 = vector.broadcast %cst_5 : f32 to vector<256x32xf32>
    %7 = arith.maximumf %5, %6 : vector<256x32xf32>
    %c0_6 = arith.constant 0 : index
    %c0_7 = arith.constant 0 : index
    %8 = vector.load %arg4[%c0_6, %c0_7] : memref<256x32xf32, #tpu.memory_space<vmem>>, vector<256x32xf32>
    tpu.vector_store %arg4[%c0_6, %c0_7], %7 {strides = array<i32>} : memref<256x32xf32, #tpu.memory_space<vmem>>, vector<256x32xf32>,
    return
  }
  func.func @transform_0(%arg0: i32) -> (i32, i32) {
    %c0_i32 = arith.constant 0 : i32
    %c0_i32_0 = arith.constant 0 : i32
    return %arg0, %c0_i32 : i32, i32
  }
  func.func @transform_1(%arg0: i32) -> (i32, i32) {
    %c0_i32 = arith.constant 0 : i32
    %c0_i32_0 = arith.constant 0 : i32
    %c0_i32_1 = arith.constant 0 : i32
    return %c0_i32, %c0_i32_0 : i32, i32
  }
  func.func @transform_2(%arg0: i32) -> (i32, i32) {
    %c0_i32 = arith.constant 0 : i32
    %c0_i32_0 = arith.constant 0 : i32
    %c0_i32_1 = arith.constant 0 : i32
    return %c0_i32, %c0_i32_0 : i32, i32
  }
  func.func @transform_3(%arg0: i32) -> (i32, i32) {
    %c0_i32 = arith.constant 0 : i32
    %c0_i32_0 = arith.constant 0 : i32
    return %arg0, %c0_i32 : i32, i32
  }
}

module attributes {stable_mosaic.version = 11 : i64} {
  func.func @_bn_stats_kernel(%arg0: i32, %arg1: memref<256x32xf32, #tpu.memory_space<vmem>>, %arg2: memref<32x16xf32, #tpu.memory_space<vmem>>, %arg3: memref<1x16xf32, #tpu.memory_space<vmem>>, %arg4: memref<1x16xf32, #tpu.memory_space<vmem>>) attributes {dimension_semantics = [#tpu.dimension_semantics<arbitrary>], iteration_bounds = array<i64: 2>, scalar_prefetch = 0 : i64, scratch_operands = 0 : i64, tpu.core_type = #tpu.core_type<tc>, window_params = [{transform_indices = @transform_0, window_bounds = array<i64: 256, 32>}, {pipeline_mode = #tpu.pipeline_mode<synchronous>, transform_indices = @transform_1, window_bounds = array<i64: 32, 16>}, {pipeline_mode = #tpu.pipeline_mode<synchronous>, transform_indices = @transform_2, window_bounds = array<i64: 1, 16>}, {pipeline_mode = #tpu.pipeline_mode<synchronous>, transform_indices = @transform_3, window_bounds = array<i64: 1, 16>}]} {
    %c0_i32 = arith.constant 0 : i32
    %0 = arith.cmpi eq, %arg0, %c0_i32 : i32
    %1 = arith.extui %0 : i1 to i32
    %c0_i32_0 = arith.constant 0 : i32
    %2 = arith.cmpi ne, %1, %c0_i32_0 : i32
    scf.if %2 {
      %cst_15 = arith.constant 0.000000e+00 : f32
      %16 = vector.broadcast %cst_15 : f32 to vector<1x16xf32>
      %c0_16 = arith.constant 0 : index
      %c0_17 = arith.constant 0 : index
      %17 = vector.load %arg3[%c0_16, %c0_17] : memref<1x16xf32, #tpu.memory_space<vmem>>, vector<1x16xf32>
      tpu.vector_store %arg3[%c0_16, %c0_17], %16 {strides = array<i32>} : memref<1x16xf32, #tpu.memory_space<vmem>>, vector<1x16xf32>,
      %cst_18 = arith.constant 0.000000e+00 : f32
      %18 = vector.broadcast %cst_18 : f32 to vector<1x16xf32>
      %c0_19 = arith.constant 0 : index
      %c0_20 = arith.constant 0 : index
      %19 = vector.load %arg4[%c0_19, %c0_20] : memref<1x16xf32, #tpu.memory_space<vmem>>, vector<1x16xf32>
      tpu.vector_store %arg4[%c0_19, %c0_20], %18 {strides = array<i32>} : memref<1x16xf32, #tpu.memory_space<vmem>>, vector<1x16xf32>,
    } else {
    }
    %c0 = arith.constant 0 : index
    %c0_1 = arith.constant 0 : index
    %3 = vector.load %arg1[%c0, %c0_1] : memref<256x32xf32, #tpu.memory_space<vmem>>, vector<256x32xf32>
    %c0_2 = arith.constant 0 : index
    %c0_3 = arith.constant 0 : index
    %4 = vector.load %arg2[%c0_2, %c0_3] : memref<32x16xf32, #tpu.memory_space<vmem>>, vector<32x16xf32>
    %cst = arith.constant dense<0.000000e+00> : vector<256x16xf32>
    %5 = tpu.matmul %3, %4, %cst {dimension_numbers = #tpu.dot_dimension_numbers<[1], [0], [0], [1], [0, 0, 1, 1], [], []>} : vector<256x32xf32>, vector<32x16xf32>, vector<256x16xf32> -> vector<256x16xf32>
    %cst_4 = arith.constant 1.000000e+00 : f32
    %6 = vector.broadcast %cst_4 : f32 to vector<1x256xf32>
    %c0_5 = arith.constant 0 : index
    %c0_6 = arith.constant 0 : index
    %7 = vector.load %arg3[%c0_5, %c0_6] : memref<1x16xf32, #tpu.memory_space<vmem>>, vector<1x16xf32>
    %cst_7 = arith.constant dense<0.000000e+00> : vector<1x16xf32>
    %8 = tpu.matmul %6, %5, %cst_7 {dimension_numbers = #tpu.dot_dimension_numbers<[1], [0], [0], [1], [0, 0, 1, 1], [], []>} : vector<1x256xf32>, vector<256x16xf32>, vector<1x16xf32> -> vector<1x16xf32>
    %9 = arith.addf %7, %8 : vector<1x16xf32>
    %c0_8 = arith.constant 0 : index
    %c0_9 = arith.constant 0 : index
    %10 = vector.load %arg3[%c0_8, %c0_9] : memref<1x16xf32, #tpu.memory_space<vmem>>, vector<1x16xf32>
    tpu.vector_store %arg3[%c0_8, %c0_9], %9 {strides = array<i32>} : memref<1x16xf32, #tpu.memory_space<vmem>>, vector<1x16xf32>,
    %c0_10 = arith.constant 0 : index
    %c0_11 = arith.constant 0 : index
    %11 = vector.load %arg4[%c0_10, %c0_11] : memref<1x16xf32, #tpu.memory_space<vmem>>, vector<1x16xf32>
    %12 = arith.mulf %5, %5 : vector<256x16xf32>
    %cst_12 = arith.constant dense<0.000000e+00> : vector<1x16xf32>
    %13 = tpu.matmul %6, %12, %cst_12 {dimension_numbers = #tpu.dot_dimension_numbers<[1], [0], [0], [1], [0, 0, 1, 1], [], []>} : vector<1x256xf32>, vector<256x16xf32>, vector<1x16xf32> -> vector<1x16xf32>
    %14 = arith.addf %11, %13 : vector<1x16xf32>
    %c0_13 = arith.constant 0 : index
    %c0_14 = arith.constant 0 : index
    %15 = vector.load %arg4[%c0_13, %c0_14] : memref<1x16xf32, #tpu.memory_space<vmem>>, vector<1x16xf32>
    tpu.vector_store %arg4[%c0_13, %c0_14], %14 {strides = array<i32>} : memref<1x16xf32, #tpu.memory_space<vmem>>, vector<1x16xf32>,
    return
  }
  func.func @transform_0(%arg0: i32) -> (i32, i32) {
    %c0_i32 = arith.constant 0 : i32
    %c0_i32_0 = arith.constant 0 : i32
    return %arg0, %c0_i32 : i32, i32
  }
  func.func @transform_1(%arg0: i32) -> (i32, i32) {
    %c0_i32 = arith.constant 0 : i32
    %c0_i32_0 = arith.constant 0 : i32
    %c0_i32_1 = arith.constant 0 : i32
    return %c0_i32, %c0_i32_0 : i32, i32
  }
  func.func @transform_2(%arg0: i32) -> (i32, i32) {
    %c0_i32 = arith.constant 0 : i32
    %c0_i32_0 = arith.constant 0 : i32
    %c0_i32_1 = arith.constant 0 : i32
    return %c0_i32, %c0_i32_0 : i32, i32
  }
  func.func @transform_3(%arg0: i32) -> (i32, i32) {
    %c0_i32 = arith.constant 0 : i32
    %c0_i32_0 = arith.constant 0 : i32
    %c0_i32_1 = arith.constant 0 : i32
    return %c0_i32, %c0_i32_0 : i32, i32
  }
}

module attributes {stable_mosaic.version = 11 : i64} {
  func.func @_conv_bn_relu_kernel(%arg0: i32, %arg1: memref<256x32xf32, #tpu.memory_space<vmem>>, %arg2: memref<32x16xf32, #tpu.memory_space<vmem>>, %arg3: memref<1x16xf32, #tpu.memory_space<vmem>>, %arg4: memref<256x16xf32, #tpu.memory_space<vmem>>) attributes {dimension_semantics = [#tpu.dimension_semantics<parallel>], iteration_bounds = array<i64: 2>, scalar_prefetch = 0 : i64, scratch_operands = 0 : i64, tpu.core_type = #tpu.core_type<tc>, window_params = [{transform_indices = @transform_0, window_bounds = array<i64: 256, 32>}, {pipeline_mode = #tpu.pipeline_mode<synchronous>, transform_indices = @transform_1, window_bounds = array<i64: 32, 16>}, {pipeline_mode = #tpu.pipeline_mode<synchronous>, transform_indices = @transform_2, window_bounds = array<i64: 1, 16>}, {transform_indices = @transform_3, window_bounds = array<i64: 256, 16>}]} {
    %c0 = arith.constant 0 : index
    %c0_0 = arith.constant 0 : index
    %0 = vector.load %arg1[%c0, %c0_0] : memref<256x32xf32, #tpu.memory_space<vmem>>, vector<256x32xf32>
    %c0_1 = arith.constant 0 : index
    %c0_2 = arith.constant 0 : index
    %1 = vector.load %arg2[%c0_1, %c0_2] : memref<32x16xf32, #tpu.memory_space<vmem>>, vector<32x16xf32>
    %cst = arith.constant dense<0.000000e+00> : vector<256x16xf32>
    %2 = tpu.matmul %0, %1, %cst {dimension_numbers = #tpu.dot_dimension_numbers<[1], [0], [0], [1], [0, 0, 1, 1], [], []>} : vector<256x32xf32>, vector<32x16xf32>, vector<256x16xf32> -> vector<256x16xf32>
    %c0_3 = arith.constant 0 : index
    %c0_4 = arith.constant 0 : index
    %3 = vector.load %arg3[%c0_3, %c0_4] : memref<1x16xf32, #tpu.memory_space<vmem>>, vector<1x16xf32>
    %4 = vector.broadcast %3 : vector<1x16xf32> to vector<256x16xf32>
    %5 = arith.addf %2, %4 : vector<256x16xf32>
    %cst_5 = arith.constant 0.000000e+00 : f32
    %6 = vector.broadcast %cst_5 : f32 to vector<256x16xf32>
    %7 = arith.maximumf %5, %6 : vector<256x16xf32>
    %c0_6 = arith.constant 0 : index
    %c0_7 = arith.constant 0 : index
    %8 = vector.load %arg4[%c0_6, %c0_7] : memref<256x16xf32, #tpu.memory_space<vmem>>, vector<256x16xf32>
    tpu.vector_store %arg4[%c0_6, %c0_7], %7 {strides = array<i32>} : memref<256x16xf32, #tpu.memory_space<vmem>>, vector<256x16xf32>,
    return
  }
  func.func @transform_0(%arg0: i32) -> (i32, i32) {
    %c0_i32 = arith.constant 0 : i32
    %c0_i32_0 = arith.constant 0 : i32
    return %arg0, %c0_i32 : i32, i32
  }
  func.func @transform_1(%arg0: i32) -> (i32, i32) {
    %c0_i32 = arith.constant 0 : i32
    %c0_i32_0 = arith.constant 0 : i32
    %c0_i32_1 = arith.constant 0 : i32
    return %c0_i32, %c0_i32_0 : i32, i32
  }
  func.func @transform_2(%arg0: i32) -> (i32, i32) {
    %c0_i32 = arith.constant 0 : i32
    %c0_i32_0 = arith.constant 0 : i32
    %c0_i32_1 = arith.constant 0 : i32
    return %c0_i32, %c0_i32_0 : i32, i32
  }
  func.func @transform_3(%arg0: i32) -> (i32, i32) {
    %c0_i32 = arith.constant 0 : i32
    %c0_i32_0 = arith.constant 0 : i32
    return %arg0, %c0_i32 : i32, i32
  }
}

</mosaic_0001>

<llo_original>
// kernel: mlp_forward.5
$region0: #{mlp_forward.5}
  #allocation0 [shape = 'u32[]', space=smem, size = 0x4, offset = 0x4, fixed_abs, tag = 'smem constant byte address 0x4 - core index']
  #allocation1 [shape = 'u32[144,128]{1,0:T(1,128)}', space=vmem, size = 0x12000, scoped, tag = 'internal scratch']
  %s0 = inlined_call_operand.vmem [shape: f32[512,4], index: 0, kind: input, shape index: {}]
  %s1 = inlined_call_operand.vmem [shape: f32[4,32], index: 1, kind: input, shape index: {}]
  %s2 = inlined_call_operand.vmem [shape: f32[1,32], index: 2, kind: input, shape index: {}]
  %s3 = inlined_call_operand.vmem [shape: f32[512,32], index: 3, kind: output, shape index: {}]
  %s4 = sld [smem:[#allocation0]]
  $region45: #{mlp_forward.5} parent=0
    _
  %s6 = ssub.s32 1, %s4
  %s7 = scalar_select 0, %s6, %s4
  loop: start=0, step=1, limit=4
  $region2: #{mlp_forward.5} parent=0 // loop_pre_header
    _
  $region3: #{mlp_forward.5} parent=0 // loop_header
    %s9 = sphi 0, %s13
    %p10 = scmp.ge.s32.totalorder %s9, 4
    %s19 = sphi 0, %s21
    %s22 = sphi 0, %s19
    %s23 = sphi 0, %s22
    %s39 = sphi 0, %s23
    %s43 = sphi 0, %s43
    %s45 = sphi 0, %s43
    %s46 = sphi 0, %s45
    %s60 = sphi 0, %s46
    %s64 = sphi 0, %s64
    %s66 = sphi 0, %s64
    %s67 = sphi 0, %s66
    %s81 = sphi 0, %s67
    %s87 = sphi 0, %s89
    %s90 = sphi 0, %s87
    %s91 = sphi 0, %s90
    %s107 = sphi 0, %s91
  $region4: #{mlp_forward.5} parent=0 // loop_header_branch
    %12 = sbr.rel (%p10) target = $region8
  $region5: #{mlp_forward.5} parent=0 // loop_body
    %s14 = ssub.s32 %s9, 1
    %s15 = ssub.s32 %s9, 2
    %s16 = sadd.s32 %s9, 1
    %s17 = ssub.s32 %s9, %s16
    %p18 = scmp.eq.s32.totalorder %s17, 0
    %s20 = sadd.s32 %s19, 1
    %s21 = scalar_select %p18, %s19, %s20
    %p24 = pneg %p18
    %p25 = scmp.eq.s32.totalorder %s9, 1
    %p26 = por %p24, %p25
    %p27 = scmp.ne.s32.totalorder %s19, %s22
    %p28 = scmp.eq.s32.totalorder %s9, 0
    %p29 = por %p27, %p28
    %p30 = scmp.ne.s32.totalorder %s19, %s22
    %p31 = scmp.eq.s32.totalorder %s14, 1
    %p32 = por %p30, %p31
    %p33 = scmp.ne.s32.totalorder %s22, %s23
    %p34 = scmp.eq.s32.totalorder %s14, 0
    %p35 = por %p33, %p34
    %p36 = scmp.ne.s32.totalorder %s22, %s23
    %p37 = scmp.eq.s32.totalorder %s15, 1
    %p38 = por %p36, %p37
    %p40 = scmp.ne.s32.totalorder %s23, %s39
    %p41 = scmp.eq.s32.totalorder %s15, 0
    %p42 = por %p40, %p41
    %s44 = sadd.s32 %s43, 1
    %p47 = scmp.eq.s32.totalorder %s9, 1
    %p48 = scmp.ne.s32.totalorder %s43, %s45
    %p49 = scmp.eq.s32.totalorder %s9, 0
    %p50 = por %p48, %p49
    %p51 = scmp.ne.s32.totalorder %s43, %s45
    %p52 = scmp.eq.s32.totalorder %s14, 1
    %p53 = por %p51, %p52
    %p54 = scmp.ne.s32.totalorder %s45, %s46
    %p55 = scmp.eq.s32.totalorder %s14, 0
    %p56 = por %p54, %p55
    %p57 = scmp.ne.s32.totalorder %s45, %s46
    %p58 = scmp.eq.s32.totalorder %s15, 1
    %p59 = por %p57, %p58
    %p61 = scmp.ne.s32.totalorder %s46, %s60
    %p62 = scmp.eq.s32.totalorder %s15, 0
    %p63 = por %p61, %p62
    %s65 = sadd.s32 %s64, 1
    %p68 = scmp.eq.s32.totalorder %s9, 1
    %p69 = scmp.ne.s32.totalorder %s64, %s66
    %p70 = scmp.eq.s32.totalorder %s9, 0
    %p71 = por %p69, %p70
    %p72 = scmp.ne.s32.totalorder %s64, %s66
    %p73 = scmp.eq.s32.totalorder %s14, 1
    %p74 = por %p72, %p73
    %p75 = scmp.ne.s32.totalorder %s66, %s67
    %p76 = scmp.eq.s32.totalorder %s14, 0
    %p77 = por %p75, %p76
    %p78 = scmp.ne.s32.totalorder %s66, %s67
    %p79 = scmp.eq.s32.totalorder %s15, 1
    %p80 = por %p78, %p79
    %p82 = scmp.ne.s32.totalorder %s67, %s81
    %p83 = scmp.eq.s32.totalorder %s15, 0
    %p84 = por %p82, %p83
    %s85 = ssub.s32 %s9, %s16
    %p86 = scmp.eq.s32.totalorder %s85, 0
    %s88 = sadd.s32 %s87, 1
    %s89 = scalar_select %p86, %s87, %s88
    %p92 = pneg %p86
    %p93 = scmp.eq.s32.totalorder %s9, 1
    %p94 = por %p92, %p93
    %p95 = scmp.ne.s32.totalorder %s87, %s90
    %p96 = scmp.eq.s32.totalorder %s9, 0
    %p97 = por %p95, %p96
    %p98 = scmp.ne.s32.totalorder %s87, %s90
    %p99 = scmp.eq.s32.totalorder %s14, 1
    %p100 = por %p98, %p99
    %p101 = scmp.ne.s32.totalorder %s90, %s91
    %p102 = scmp.eq.s32.totalorder %s14, 0
    %p103 = por %p101, %p102
    %p104 = scmp.ne.s32.totalorder %s90, %s91
    %p105 = scmp.eq.s32.totalorder %s15, 1
    %p106 = por %p104, %p105
    %p108 = scmp.ne.s32.totalorder %s91, %s107
    %p109 = scmp.eq.s32.totalorder %s15, 0
    %p110 = por %p108, %p109
    %p111 = scmp.le.s32.totalorder 1, %s9
    %p112 = scmp.lt.s32.totalorder %s9, 3
    %p113 = pnand %p111, %p112
    %p114 = pneg %p113
    // Predicated region
    $region9: #{mlp_forward.5} parent=5 // pred_check
      _
    $region10: #{mlp_forward.5} parent=5 // pred_check_branch
      %116 = sbr.rel (%p113) target = $region12
    $region11: #{mlp_forward.5} parent=5 // pred_region
      %s117 = ssub.s32 %s9, 1
      // Predicated region
      $region13: #{mlp_forward.5} parent=11 // pred_check
        %p118 = pneg %p56
      $region14: #{mlp_forward.5} parent=11 // pred_check_branch
        %120 = sbr.rel (%p118) target = $region16
      $region15: #{mlp_forward.5} parent=11 // pred_region
        _
      $region16: #{mlp_forward.5} parent=11 // pred_fallthru
        _
      // Predicated region
      $region17: #{mlp_forward.5} parent=11 // pred_check
        %p121 = pneg %p77
      $region18: #{mlp_forward.5} parent=11 // pred_check_branch
        %123 = sbr.rel (%p121) target = $region20
      $region19: #{mlp_forward.5} parent=11 // pred_region
        _
      $region20: #{mlp_forward.5} parent=11 // pred_fallthru
        _
    $region12: #{mlp_forward.5} parent=5 // pred_fallthru
      _
    %p124 = scmp.lt.s32.totalorder %s9, 2
    // Predicated region
    $region21: #{mlp_forward.5} parent=5 // pred_check
      %p125 = pneg %p124
    $region22: #{mlp_forward.5} parent=5 // pred_check_branch
      %127 = sbr.rel (%p125) target = $region24
    $region23: #{mlp_forward.5} parent=5 // pred_region
      // Predicated region
      $region25: #{mlp_forward.5} parent=23 // pred_check
        %p128 = pneg %p29
      $region26: #{mlp_forward.5} parent=23 // pred_check_branch
        %130 = sbr.rel (%p128) target = $region28
      $region27: #{mlp_forward.5} parent=23 // pred_region
        %s131 = smul.u32 32, %s9
        %p132 = scmp.lt.s32.totalorder %s131, 63
        %s133 = scalar_select %p132, %s131, 63
        %s134 = smul.addr %s133, 8
        %s135 = scalar_lea.vmem %s0, %s134
        %s136 = smul.u32 32, %s9
      $region28: #{mlp_forward.5} parent=23 // pred_fallthru
        _
    $region24: #{mlp_forward.5} parent=5 // pred_fallthru
      _
    %p137 = scmp.le.s32.totalorder 1, %s9
    %p138 = scmp.lt.s32.totalorder %s9, 3
    %p139 = pnand %p137, %p138
    %p140 = pneg %p139
    // Predicated region
    $region29: #{mlp_forward.5} parent=5 // pred_check
      _
    $region30: #{mlp_forward.5} parent=5 // pred_check_branch
      %142 = sbr.rel (%p139) target = $region32
    $region31: #{mlp_forward.5} parent=5 // pred_region
      %s143 = ssub.s32 %s9, 1
      %s144 = smul.u32 32, %s14
      %p145 = scmp.lt.s32.totalorder %s144, 63
      %s146 = scalar_select %p145, %s144, 63
      %s147 = smul.addr %s146, 8
      %s148 = scalar_lea.vmem %s0, %s147
      %p149 = pneg %p35
      %p150 = pneg %p32
      %p151 = pneg %p56
      %p152 = pneg %p53
      %p153 = pneg %p77
      %p154 = pneg %p74
      %p155 = pneg %p103
      %p156 = pneg %p100
      %s157 = smul.u32 32, %s14
      %p158 = scmp.lt.s32.totalorder %s157, 63
      %s159 = scalar_select %p158, %s157, 63
      %s160 = smul.addr %s159, 8
      %s161 = scalar_lea.vmem %s3, %s160
      %s162 = smul.u32 32, %s14
      %p163 = scmp.lt.s32.totalorder %s162, 63
      %s164 = scalar_select %p163, %s162, 63
      %s165 = smul.addr %s164, 8
      %s166 = scalar_lea.vmem %s0, %s165
      %s167 = smul.u32 32, %s14
      %s168 = smul.u32 32, %s14
      %p169 = scmp.lt.s32.totalorder %s168, 63
      %s170 = scalar_select %p169, %s168, 63
      %s171 = smul.addr %s170, 8
      %s172 = scalar_lea.vmem %s3, %s171
      %s173 = smul.u32 32, %s14
      %v174 = vld [vmem:[%s166] sm:$0xff]
      %v175 = vld [vmem:[%s166 + $0x8] sm:$0xff]
      %v176 = vld [vmem:[%s166 + $0x10] sm:$0xff]
      %v177 = vld [vmem:[%s166 + $0x18] sm:$0xff]
      %v178 = vld [vmem:[%s166 + $0x20] sm:$0xff]
      %v179 = vld [vmem:[%s166 + $0x28] sm:$0xff]
      %v180 = vld [vmem:[%s166 + $0x30] sm:$0xff]
      %v181 = vld [vmem:[%s166 + $0x38] sm:$0xff]
      %v182 = vld [vmem:[%s166 + $0x40] sm:$0xff]
      %v183 = vld [vmem:[%s166 + $0x48] sm:$0xff]
      %v184 = vld [vmem:[%s166 + $0x50] sm:$0xff]
      %v185 = vld [vmem:[%s166 + $0x58] sm:$0xff]
      %v186 = vld [vmem:[%s166 + $0x60] sm:$0xff]
      %v187 = vld [vmem:[%s166 + $0x68] sm:$0xff]
      %v188 = vld [vmem:[%s166 + $0x70] sm:$0xff]
      %v189 = vld [vmem:[%s166 + $0x78] sm:$0xff]
      %v190 = vld [vmem:[%s166 + $0x80] sm:$0xff]
      %v191 = vld [vmem:[%s166 + $0x88] sm:$0xff]
      %v192 = vld [vmem:[%s166 + $0x90] sm:$0xff]
      %v193 = vld [vmem:[%s166 + $0x98] sm:$0xff]
      %v194 = vld [vmem:[%s166 + $0xa0] sm:$0xff]
      %v195 = vld [vmem:[%s166 + $0xa8] sm:$0xff]
      %v196 = vld [vmem:[%s166 + $0xb0] sm:$0xff]
      %v197 = vld [vmem:[%s166 + $0xb8] sm:$0xff]
      %v198 = vld [vmem:[%s166 + $0xc0] sm:$0xff]
      %v199 = vld [vmem:[%s166 + $0xc8] sm:$0xff]
      %v200 = vld [vmem:[%s166 + $0xd0] sm:$0xff]
      %v201 = vld [vmem:[%s166 + $0xd8] sm:$0xff]
      %v202 = vld [vmem:[%s166 + $0xe0] sm:$0xff]
      %v203 = vld [vmem:[%s166 + $0xe8] sm:$0xff]
      %v204 = vld [vmem:[%s166 + $0xf0] sm:$0xff]
      %v205 = vld [vmem:[%s166 + $0xf8] sm:$0xff]
      %v206 = vld [vmem:[%s1] sm:$0xf]
      %v207 = vld [vmem:[%s2] sm:$0x1]
      %v209 = vlaneseq
      %v210 = vshrl.u32 %v209, 7
      %v211 = vsub.s32 0, %v210
      %v212 = vrot.slane %v207, %v211
      %vm214 = vcmask 31744
      %v216 = vsel %vm214, %v174, 0
      %v219 = vsel %vm214, %v175, 0
      %v222 = vsel %vm214, %v176, 0
      %v225 = vsel %vm214, %v177, 0
      %v228 = vsel %vm214, %v178, 0
      %v231 = vsel %vm214, %v179, 0
      %v234 = vsel %vm214, %v180, 0
      %v237 = vsel %vm214, %v181, 0
      %v240 = vsel %vm214, %v182, 0
      %v243 = vsel %vm214, %v183, 0
      %v246 = vsel %vm214, %v184, 0
      %v249 = vsel %vm214, %v185, 0
      %v252 = vsel %vm214, %v186, 0
      %v255 = vsel %vm214, %v187, 0
      %v258 = vsel %vm214, %v188, 0
      %v261 = vsel %vm214, %v189, 0
      %v264 = vsel %vm214, %v190, 0
      %v267 = vsel %vm214, %v191, 0
      %v270 = vsel %vm214, %v192, 0
      %v273 = vsel %vm214, %v193, 0
      %v276 = vsel %vm214, %v194, 0
      %v279 = vsel %vm214, %v195, 0
      %v282 = vsel %vm214, %v196, 0
      %v285 = vsel %vm214, %v197, 0
      %v288 = vsel %vm214, %v198, 0
      %v291 = vsel %vm214, %v199, 0
      %v294 = vsel %vm214, %v200, 0
      %v297 = vsel %vm214, %v201, 0
      %v300 = vsel %vm214, %v202, 0
      %v303 = vsel %vm214, %v203, 0
      %v306 = vsel %vm214, %v204, 0
      %v309 = vsel %vm214, %v205, 0
      %vm311 = vcmask 1043456
      %v313 = vsel %vm311, %v206, 0
      %315 = vmatprep.subr.mxu0 0.0
      %316 = vmatpush1.msra.mxu0 0.0
      %317 = vmatprep.subr.mxu0 0.0
      %318 = vmatpush1.msra.mxu0 0.0
      %319 = vmatprep.subr.mxu0 0.0
      %320 = vmatpush1.msra.mxu0 0.0
      %321 = vmatprep.subr.mxu0 0.0
      %322 = vmatpush1.msra.mxu0 0.0
      %323 = vmatprep.subr.mxu0 0.0
      %324 = vmatpush1.msra.mxu0 0.0
      %325 = vmatprep.subr.mxu0 0.0
      %326 = vmatpush1.msra.mxu0 0.0
      %327 = vmatprep.subr.mxu0 0.0
      %328 = vmatpush1.msra.mxu0 0.0
      %329 = vmatprep.subr.mxu0 0.0
      %330 = vmatpush1.msra.mxu0 0.0
      %331 = vmatprep.subr.mxu0 0.0
      %332 = vmatpush1.msra.mxu0 0.0
      %333 = vmatprep.subr.mxu0 0.0
      %334 = vmatpush1.msra.mxu0 0.0
      %335 = vmatprep.subr.mxu0 0.0
      %336 = vmatpush1.msra.mxu0 0.0
      %337 = vmatprep.subr.mxu0 0.0
      %338 = vmatpush1.msra.mxu0 0.0
      %339 = vmatprep.subr.mxu0 0.0
      %340 = vmatpush1.msra.mxu0 0.0
      %341 = vmatprep.subr.mxu0 0.0
      %342 = vmatpush1.msra.mxu0 0.0
      %343 = vmatprep.subr.mxu0 0.0
      %344 = vmatpush1.msra.mxu0 0.0
      %345 = vmatprep.subr.mxu0 0.0
      %346 = vmatpush1.msra.mxu0 %v313
      %347 = vmatprep.subr.mxu0 0.0
      %348 = vmatpush2.msra.mxu0 0.0
      %349 = vmatprep.subr.mxu0 0.0
      %350 = vmatpush2.msra.mxu0 0.0
      %351 = vmatprep.subr.mxu0 0.0
      %352 = vmatpush2.msra.mxu0 0.0
      %353 = vmatprep.subr.mxu0 0.0
      %354 = vmatpush2.msra.mxu0 0.0
      %355 = vmatprep.subr.mxu0 0.0
      %356 = vmatpush2.msra.mxu0 0.0
      %357 = vmatprep.subr.mxu0 0.0
      %358 = vmatpush2.msra.mxu0 0.0
      %359 = vmatprep.subr.mxu0 0.0
      %360 = vmatpush2.msra.mxu0 0.0
      %361 = vmatprep.subr.mxu0 0.0
      %362 = vmatpush2.msra.mxu0 0.0
      %363 = vmatprep.subr.mxu0 0.0
      %364 = vmatpush2.msra.mxu0 0.0
      %365 = vmatprep.subr.mxu0 0.0
      %366 = vmatpush2.msra.mxu0 0.0
      %367 = vmatprep.subr.mxu0 0.0
      %368 = vmatpush2.msra.mxu0 0.0
      %369 = vmatprep.subr.mxu0 0.0
      %370 = vmatpush2.msra.mxu0 0.0
      %371 = vmatprep.subr.mxu0 0.0
      %372 = vmatpush2.msra.mxu0 0.0
      %373 = vmatprep.subr.mxu0 0.0
      %374 = vmatpush2.msra.mxu0 0.0
      %375 = vmatprep.subr.mxu0 0.0
      %376 = vmatpush2.msra.mxu0 0.0
      %377 = vmatprep.subr.mxu0 0.0
      %378 = vmatpush2.msra.mxu0 0.0
      %379 = vmatprep.mubr.f32.mxu0 0.0
      %380 = vmatmul.mubr.f32.gmra.mxu0 %v216
      %v381 = vpop.f32.mrf.mxu0
      %v382 = vadd.f32 %v212, %v381
      %v383 = vpop.f32.mrf.mxu0
      %384 = vmatprep.mubr.f32.mxu0 0.0
      %385 = vmatmul.mubr.f32.gmra.mxu0 %v219
      %v386 = vpop.f32.mrf.mxu0
      %v387 = vadd.f32 %v212, %v386
      %v388 = vpop.f32.mrf.mxu0
      %389 = vmatprep.mubr.f32.mxu0 0.0
      %390 = vmatmul.mubr.f32.gmra.mxu0 %v222
      %v391 = vpop.f32.mrf.mxu0
      %v392 = vadd.f32 %v212, %v391
      %v393 = vpop.f32.mrf.mxu0
      %394 = vmatprep.mubr.f32.mxu0 0.0
      %395 = vmatmul.mubr.f32.gmra.mxu0 %v225
      %v396 = vpop.f32.mrf.mxu0
      %v397 = vadd.f32 %v212, %v396
      %v398 = vpop.f32.mrf.mxu0
      %399 = vmatprep.mubr.f32.mxu0 0.0
      %400 = vmatmul.mubr.f32.gmra.mxu0 %v228
      %v401 = vpop.f32.mrf.mxu0
      %v402 = vadd.f32 %v212, %v401
      %v403 = vpop.f32.mrf.mxu0
      %404 = vmatprep.mubr.f32.mxu0 0.0
      %405 = vmatmul.mubr.f32.gmra.mxu0 %v231
      %v406 = vpop.f32.mrf.mxu0
      %v407 = vadd.f32 %v212, %v406
      %v408 = vpop.f32.mrf.mxu0
      %409 = vmatprep.mubr.f32.mxu0 0.0
      %410 = vmatmul.mubr.f32.gmra.mxu0 %v234
      %v411 = vpop.f32.mrf.mxu0
      %v412 = vadd.f32 %v212, %v411
      %v413 = vpop.f32.mrf.mxu0
      %414 = vmatprep.mubr.f32.mxu0 0.0
      %415 = vmatmul.mubr.f32.gmra.mxu0 %v237
      %v416 = vpop.f32.mrf.mxu0
      %v417 = vadd.f32 %v212, %v416
      %v418 = vpop.f32.mrf.mxu0
      %419 = vmatprep.mubr.f32.mxu0 0.0
      %420 = vmatmul.mubr.f32.gmra.mxu0 %v240
      %v421 = vpop.f32.mrf.mxu0
      %v422 = vadd.f32 %v212, %v421
      %v423 = vpop.f32.mrf.mxu0
      %424 = vmatprep.mubr.f32.mxu0 0.0
      %425 = vmatmul.mubr.f32.gmra.mxu0 %v243
      %v426 = vpop.f32.mrf.mxu0
      %v427 = vadd.f32 %v212, %v426
      %v428 = vpop.f32.mrf.mxu0
      %429 = vmatprep.mubr.f32.mxu0 0.0
      %430 = vmatmul.mubr.f32.gmra.mxu0 %v246
      %v431 = vpop.f32.mrf.mxu0
      %v432 = vadd.f32 %v212, %v431
      %v433 = vpop.f32.mrf.mxu0
      %434 = vmatprep.mubr.f32.mxu0 0.0
      %435 = vmatmul.mubr.f32.gmra.mxu0 %v249
      %v436 = vpop.f32.mrf.mxu0
      %v437 = vadd.f32 %v212, %v436
      %v438 = vpop.f32.mrf.mxu0
      %439 = vmatprep.mubr.f32.mxu0 0.0
      %440 = vmatmul.mubr.f32.gmra.mxu0 %v252
      %v441 = vpop.f32.mrf.mxu0
      %v442 = vadd.f32 %v212, %v441
      %v443 = vpop.f32.mrf.mxu0
      %444 = vmatprep.mubr.f32.mxu0 0.0
      %445 = vmatmul.mubr.f32.gmra.mxu0 %v255
      %v446 = vpop.f32.mrf.mxu0
      %v447 = vadd.f32 %v212, %v446
      %v448 = vpop.f32.mrf.mxu0
      %449 = vmatprep.mubr.f32.mxu0 0.0
      %450 = vmatmul.mubr.f32.gmra.mxu0 %v258
      %v451 = vpop.f32.mrf.mxu0
      %v452 = vadd.f32 %v212, %v451
      %v453 = vpop.f32.mrf.mxu0
      %454 = vmatprep.mubr.f32.mxu0 0.0
      %455 = vmatmul.mubr.f32.gmra.mxu0 %v261
      %v456 = vpop.f32.mrf.mxu0
      %v457 = vadd.f32 %v212, %v456
      %v458 = vpop.f32.mrf.mxu0
      %459 = vmatprep.mubr.f32.mxu0 0.0
      %460 = vmatmul.mubr.f32.gmra.mxu0 %v264
      %v461 = vpop.f32.mrf.mxu0
      %v462 = vadd.f32 %v212, %v461
      %v463 = vpop.f32.mrf.mxu0
      %464 = vmatprep.mubr.f32.mxu0 0.0
      %465 = vmatmul.mubr.f32.gmra.mxu0 %v267
      %v466 = vpop.f32.mrf.mxu0
      %v467 = vadd.f32 %v212, %v466
      %v468 = vpop.f32.mrf.mxu0
      %469 = vmatprep.mubr.f32.mxu0 0.0
      %470 = vmatmul.mubr.f32.gmra.mxu0 %v270
      %v471 = vpop.f32.mrf.mxu0
      %v472 = vadd.f32 %v212, %v471
      %v473 = vpop.f32.mrf.mxu0
      %474 = vmatprep.mubr.f32.mxu0 0.0
      %475 = vmatmul.mubr.f32.gmra.mxu0 %v273
      %v476 = vpop.f32.mrf.mxu0
      %v477 = vadd.f32 %v212, %v476
      %v478 = vpop.f32.mrf.mxu0
      %479 = vmatprep.mubr.f32.mxu0 0.0
      %480 = vmatmul.mubr.f32.gmra.mxu0 %v276
      %v481 = vpop.f32.mrf.mxu0
      %v482 = vadd.f32 %v212, %v481
      %v483 = vpop.f32.mrf.mxu0
      %484 = vmatprep.mubr.f32.mxu0 0.0
      %485 = vmatmul.mubr.f32.gmra.mxu0 %v279
      %v486 = vpop.f32.mrf.mxu0
      %v487 = vadd.f32 %v212, %v486
      %v488 = vpop.f32.mrf.mxu0
      %489 = vmatprep.mubr.f32.mxu0 0.0
      %490 = vmatmul.mubr.f32.gmra.mxu0 %v282
      %v491 = vpop.f32.mrf.mxu0
      %v492 = vadd.f32 %v212, %v491
      %v493 = vpop.f32.mrf.mxu0
      %494 = vmatprep.mubr.f32.mxu0 0.0
      %495 = vmatmul.mubr.f32.gmra.mxu0 %v285
      %v496 = vpop.f32.mrf.mxu0
      %v497 = vadd.f32 %v212, %v496
      %v498 = vpop.f32.mrf.mxu0
      %499 = vmatprep.mubr.f32.mxu0 0.0
      %500 = vmatmul.mubr.f32.gmra.mxu0 %v288
      %v501 = vpop.f32.mrf.mxu0
      %v502 = vadd.f32 %v212, %v501
      %v503 = vpop.f32.mrf.mxu0
      %504 = vmatprep.mubr.f32.mxu0 0.0
      %505 = vmatmul.mubr.f32.gmra.mxu0 %v291
      %v506 = vpop.f32.mrf.mxu0
      %v507 = vadd.f32 %v212, %v506
      %v508 = vpop.f32.mrf.mxu0
      %509 = vmatprep.mubr.f32.mxu0 0.0
      %510 = vmatmul.mubr.f32.gmra.mxu0 %v294
      %v511 = vpop.f32.mrf.mxu0
      %v512 = vadd.f32 %v212, %v511
      %v513 = vpop.f32.mrf.mxu0
      %514 = vmatprep.mubr.f32.mxu0 0.0
      %515 = vmatmul.mubr.f32.gmra.mxu0 %v297
      %v516 = vpop.f32.mrf.mxu0
      %v517 = vadd.f32 %v212, %v516
      %v518 = vpop.f32.mrf.mxu0
      %519 = vmatprep.mubr.f32.mxu0 0.0
      %520 = vmatmul.mubr.f32.gmra.mxu0 %v300
      %v521 = vpop.f32.mrf.mxu0
      %v522 = vadd.f32 %v212, %v521
      %v523 = vpop.f32.mrf.mxu0
      %524 = vmatprep.mubr.f32.mxu0 0.0
      %525 = vmatmul.mubr.f32.gmra.mxu0 %v303
      %v526 = vpop.f32.mrf.mxu0
      %v527 = vadd.f32 %v212, %v526
      %v528 = vpop.f32.mrf.mxu0
      %529 = vmatprep.mubr.f32.mxu0 0.0
      %530 = vmatmul.mubr.f32.gmra.mxu0 %v306
      %v531 = vpop.f32.mrf.mxu0
      %v532 = vadd.f32 %v212, %v531
      %v533 = vpop.f32.mrf.mxu0
      %534 = vmatprep.mubr.f32.mxu0 0.0
      %535 = vmatmul.mubr.f32.gmra.mxu0 %v309
      %v536 = vpop.f32.mrf.mxu0
      %v537 = vadd.f32 %v212, %v536
      %v538 = vpop.f32.mrf.mxu0
      %539 = vdwg.mxu0
      %v540 = vmax.f32 %v382, 0.0
      %v541 = vmax.f32 %v387, 0.0
      %v542 = vmax.f32 %v392, 0.0
      %v543 = vmax.f32 %v397, 0.0
      %v544 = vmax.f32 %v402, 0.0
      %v545 = vmax.f32 %v407, 0.0
      %v546 = vmax.f32 %v412, 0.0
      %v547 = vmax.f32 %v417, 0.0
      %v548 = vmax.f32 %v422, 0.0
      %v549 = vmax.f32 %v427, 0.0
      %v550 = vmax.f32 %v432, 0.0
      %v551 = vmax.f32 %v437, 0.0
      %v552 = vmax.f32 %v442, 0.0
      %v553 = vmax.f32 %v447, 0.0
      %v554 = vmax.f32 %v452, 0.0
      %v555 = vmax.f32 %v457, 0.0
      %v556 = vmax.f32 %v462, 0.0
      %v557 = vmax.f32 %v467, 0.0
      %v558 = vmax.f32 %v472, 0.0
      %v559 = vmax.f32 %v477, 0.0
      %v560 = vmax.f32 %v482, 0.0
      %v561 = vmax.f32 %v487, 0.0
      %v562 = vmax.f32 %v492, 0.0
      %v563 = vmax.f32 %v497, 0.0
      %v564 = vmax.f32 %v502, 0.0
      %v565 = vmax.f32 %v507, 0.0
      %v566 = vmax.f32 %v512, 0.0
      %v567 = vmax.f32 %v517, 0.0
      %v568 = vmax.f32 %v522, 0.0
      %v569 = vmax.f32 %v527, 0.0
      %v570 = vmax.f32 %v532, 0.0
      %v571 = vmax.f32 %v537, 0.0
      %vm572 = vcmask 261120
      %573 = vst.msk [vmem:[%s172] sm:$0xff] %vm572, %v540
      %574 = vst.msk [vmem:[%s172 + $0x8] sm:$0xff] %vm572, %v541
      %575 = vst.msk [vmem:[%s172 + $0x10] sm:$0xff] %vm572, %v542
      %576 = vst.msk [vmem:[%s172 + $0x18] sm:$0xff] %vm572, %v543
      %577 = vst.msk [vmem:[%s172 + $0x20] sm:$0xff] %vm572, %v544
      %578 = vst.msk [vmem:[%s172 + $0x28] sm:$0xff] %vm572, %v545
      %579 = vst.msk [vmem:[%s172 + $0x30] sm:$0xff] %vm572, %v546
      %580 = vst.msk [vmem:[%s172 + $0x38] sm:$0xff] %vm572, %v547
      %581 = vst.msk [vmem:[%s172 + $0x40] sm:$0xff] %vm572, %v548
      %582 = vst.msk [vmem:[%s172 + $0x48] sm:$0xff] %vm572, %v549
      %583 = vst.msk [vmem:[%s172 + $0x50] sm:$0xff] %vm572, %v550
      %584 = vst.msk [vmem:[%s172 + $0x58] sm:$0xff] %vm572, %v551
      %585 = vst.msk [vmem:[%s172 + $0x60] sm:$0xff] %vm572, %v552
      %586 = vst.msk [vmem:[%s172 + $0x68] sm:$0xff] %vm572, %v553
      %587 = vst.msk [vmem:[%s172 + $0x70] sm:$0xff] %vm572, %v554
      %588 = vst.msk [vmem:[%s172 + $0x78] sm:$0xff] %vm572, %v555
      %589 = vst.msk [vmem:[%s172 + $0x80] sm:$0xff] %vm572, %v556
      %590 = vst.msk [vmem:[%s172 + $0x88] sm:$0xff] %vm572, %v557
      %591 = vst.msk [vmem:[%s172 + $0x90] sm:$0xff] %vm572, %v558
      %592 = vst.msk [vmem:[%s172 + $0x98] sm:$0xff] %vm572, %v559
      %593 = vst.msk [vmem:[%s172 + $0xa0] sm:$0xff] %vm572, %v560
      %594 = vst.msk [vmem:[%s172 + $0xa8] sm:$0xff] %vm572, %v561
      %595 = vst.msk [vmem:[%s172 + $0xb0] sm:$0xff] %vm572, %v562
      %596 = vst.msk [vmem:[%s172 + $0xb8] sm:$0xff] %vm572, %v563
      %597 = vst.msk [vmem:[%s172 + $0xc0] sm:$0xff] %vm572, %v564
      %598 = vst.msk [vmem:[%s172 + $0xc8] sm:$0xff] %vm572, %v565
      %599 = vst.msk [vmem:[%s172 + $0xd0] sm:$0xff] %vm572, %v566
      %600 = vst.msk [vmem:[%s172 + $0xd8] sm:$0xff] %vm572, %v567
      %601 = vst.msk [vmem:[%s172 + $0xe0] sm:$0xff] %vm572, %v568
      %602 = vst.msk [vmem:[%s172 + $0xe8] sm:$0xff] %vm572, %v569
      %603 = vst.msk [vmem:[%s172 + $0xf0] sm:$0xff] %vm572, %v570
      %604 = vst.msk [vmem:[%s172 + $0xf8] sm:$0xff] %vm572, %v571
      %s605 = smul.u32 32, %s14
      %p606 = scmp.lt.s32.totalorder %s605, 63
      %s607 = scalar_select %p606, %s605, 63
      %s608 = smul.addr %s607, 8
      %s609 = scalar_lea.vmem %s3, %s608
      // Predicated region
      $region33: #{mlp_forward.5} parent=31 // pred_check
        %p610 = pneg %p100
      $region34: #{mlp_forward.5} parent=31 // pred_check_branch
        %612 = sbr.rel (%p610) target = $region36
      $region35: #{mlp_forward.5} parent=31 // pred_region
        %s613 = smul.u32 32, %s14
      $region36: #{mlp_forward.5} parent=31 // pred_fallthru
        _
    $region32: #{mlp_forward.5} parent=5 // pred_fallthru
      _
    %p614 = scmp.le.s32.totalorder 2, %s9
    // Predicated region
    $region37: #{mlp_forward.5} parent=5 // pred_check
      %p615 = pneg %p614
    $region38: #{mlp_forward.5} parent=5 // pred_check_branch
      %617 = sbr.rel (%p615) target = $region40
    $region39: #{mlp_forward.5} parent=5 // pred_region
      %s618 = ssub.s32 %s9, 2
      // Predicated region
      $region41: #{mlp_forward.5} parent=39 // pred_check
        %p619 = pneg %p106
      $region42: #{mlp_forward.5} parent=39 // pred_check_branch
        %621 = sbr.rel (%p619) target = $region44
      $region43: #{mlp_forward.5} parent=39 // pred_region
        %s622 = smul.u32 32, %s15
        %p623 = scmp.lt.s32.totalorder %s622, 63
        %s624 = scalar_select %p623, %s622, 63
        %s625 = smul.addr %s624, 8
        %s626 = scalar_lea.vmem %s3, %s625
      $region44: #{mlp_forward.5} parent=39 // pred_fallthru
        _
    $region40: #{mlp_forward.5} parent=5 // pred_fallthru
      _
  $region6: #{mlp_forward.5} parent=0 // loop_footer
    %s13 = sadd.s32 1, %s9
  $region7: #{mlp_forward.5} parent=0 // loop_footer_branch
    %8 = sbr.rel target = $region3
  $region8: #{mlp_forward.5} parent=0 // loop_exit
    _

// kernel: mlp_forward.4
$region0: #{mlp_forward.4}
  #allocation0 [shape = 'u32[]', space=smem, size = 0x4, offset = 0x4, fixed_abs, tag = 'smem constant byte address 0x4 - core index']
  #allocation1 [shape = 'u32[144,128]{1,0:T(1,128)}', space=vmem, size = 0x12000, scoped, tag = 'internal scratch']
  %s0 = inlined_call_operand.vmem [shape: f32[512,4], index: 0, kind: input, shape index: {}]
  %s1 = inlined_call_operand.vmem [shape: f32[4,32], index: 1, kind: input, shape index: {}]
  %s2 = inlined_call_operand.vmem [shape: f32[1,32], index: 2, kind: output, shape index: {0}]
  %s3 = inlined_call_operand.vmem [shape: f32[1,32], index: 3, kind: output, shape index: {1}]
  %4 = xla_tuple %s2, %s3
  %s5 = sld [smem:[#allocation0]]
  $region53: #{mlp_forward.4} parent=0
    _
  %s7 = ssub.s32 1, %s5
  %s8 = scalar_select 0, %s7, %s5
  loop: start=0, step=1, limit=4
  $region2: #{mlp_forward.4} parent=0 // loop_pre_header
    _
  $region3: #{mlp_forward.4} parent=0 // loop_header
    %s10 = sphi 0, %s14
    %p11 = scmp.ge.s32.totalorder %s10, 4
    %s20 = sphi 0, %s22
    %s23 = sphi 0, %s20
    %s24 = sphi 0, %s23
    %s40 = sphi 0, %s24
    %s44 = sphi 0, %s44
    %s46 = sphi 0, %s44
    %s47 = sphi 0, %s46
    %s61 = sphi 0, %s47
    %s65 = sphi 0, %s65
    %s67 = sphi 0, %s65
    %s68 = sphi 0, %s67
    %s82 = sphi 0, %s68
    %s86 = sphi 0, %s86
    %s88 = sphi 0, %s86
    %s89 = sphi 0, %s88
    %s103 = sphi 0, %s89
  $region4: #{mlp_forward.4} parent=0 // loop_header_branch
    %13 = sbr.rel (%p11) target = $region8
  $region5: #{mlp_forward.4} parent=0 // loop_body
    %s15 = ssub.s32 %s10, 1
    %s16 = ssub.s32 %s10, 2
    %s17 = sadd.s32 %s10, 1
    %s18 = ssub.s32 %s10, %s17
    %p19 = scmp.eq.s32.totalorder %s18, 0
    %s21 = sadd.s32 %s20, 1
    %s22 = scalar_select %p19, %s20, %s21
    %p25 = pneg %p19
    %p26 = scmp.eq.s32.totalorder %s10, 1
    %p27 = por %p25, %p26
    %p28 = scmp.ne.s32.totalorder %s20, %s23
    %p29 = scmp.eq.s32.totalorder %s10, 0
    %p30 = por %p28, %p29
    %p31 = scmp.ne.s32.totalorder %s20, %s23
    %p32 = scmp.eq.s32.totalorder %s15, 1
    %p33 = por %p31, %p32
    %p34 = scmp.ne.s32.totalorder %s23, %s24
    %p35 = scmp.eq.s32.totalorder %s15, 0
    %p36 = por %p34, %p35
    %p37 = scmp.ne.s32.totalorder %s23, %s24
    %p38 = scmp.eq.s32.totalorder %s16, 1
    %p39 = por %p37, %p38
    %p41 = scmp.ne.s32.totalorder %s24, %s40
    %p42 = scmp.eq.s32.totalorder %s16, 0
    %p43 = por %p41, %p42
    %s45 = sadd.s32 %s44, 1
    %p48 = scmp.eq.s32.totalorder %s10, 1
    %p49 = scmp.ne.s32.totalorder %s44, %s46
    %p50 = scmp.eq.s32.totalorder %s10, 0
    %p51 = por %p49, %p50
    %p52 = scmp.ne.s32.totalorder %s44, %s46
    %p53 = scmp.eq.s32.totalorder %s15, 1
    %p54 = por %p52, %p53
    %p55 = scmp.ne.s32.totalorder %s46, %s47
    %p56 = scmp.eq.s32.totalorder %s15, 0
    %p57 = por %p55, %p56
    %p58 = scmp.ne.s32.totalorder %s46, %s47
    %p59 = scmp.eq.s32.totalorder %s16, 1
    %p60 = por %p58, %p59
    %p62 = scmp.ne.s32.totalorder %s47, %s61
    %p63 = scmp.eq.s32.totalorder %s16, 0
    %p64 = por %p62, %p63
    %s66 = sadd.s32 %s65, 1
    %p69 = scmp.eq.s32.totalorder %s10, 1
    %p70 = scmp.ne.s32.totalorder %s65, %s67
    %p71 = scmp.eq.s32.totalorder %s10, 0
    %p72 = por %p70, %p71
    %p73 = scmp.ne.s32.totalorder %s65, %s67
    %p74 = scmp.eq.s32.totalorder %s15, 1
    %p75 = por %p73, %p74
    %p76 = scmp.ne.s32.totalorder %s67, %s68
    %p77 = scmp.eq.s32.totalorder %s15, 0
    %p78 = por %p76, %p77
    %p79 = scmp.ne.s32.totalorder %s67, %s68
    %p80 = scmp.eq.s32.totalorder %s16, 1
    %p81 = por %p79, %p80
    %p83 = scmp.ne.s32.totalorder %s68, %s82
    %p84 = scmp.eq.s32.totalorder %s16, 0
    %p85 = por %p83, %p84
    %s87 = sadd.s32 %s86, 1
    %p90 = scmp.eq.s32.totalorder %s10, 1
    %p91 = scmp.ne.s32.totalorder %s86, %s88
    %p92 = scmp.eq.s32.totalorder %s10, 0
    %p93 = por %p91, %p92
    %p94 = scmp.ne.s32.totalorder %s86, %s88
    %p95 = scmp.eq.s32.totalorder %s15, 1
    %p96 = por %p94, %p95
    %p97 = scmp.ne.s32.totalorder %s88, %s89
    %p98 = scmp.eq.s32.totalorder %s15, 0
    %p99 = por %p97, %p98
    %p100 = scmp.ne.s32.totalorder %s88, %s89
    %p101 = scmp.eq.s32.totalorder %s16, 1
    %p102 = por %p100, %p101
    %p104 = scmp.ne.s32.totalorder %s89, %s103
    %p105 = scmp.eq.s32.totalorder %s16, 0
    %p106 = por %p104, %p105
    %p107 = scmp.le.s32.totalorder 1, %s10
    %p108 = scmp.lt.s32.totalorder %s10, 3
    %p109 = pnand %p107, %p108
    %p110 = pneg %p109
    // Predicated region
    $region9: #{mlp_forward.4} parent=5 // pred_check
      _
    $region10: #{mlp_forward.4} parent=5 // pred_check_branch
      %112 = sbr.rel (%p109) target = $region12
    $region11: #{mlp_forward.4} parent=5 // pred_region
      %s113 = ssub.s32 %s10, 1
      // Predicated region
      $region13: #{mlp_forward.4} parent=11 // pred_check
        %p114 = pneg %p57
      $region14: #{mlp_forward.4} parent=11 // pred_check_branch
        %116 = sbr.rel (%p114) target = $region16
      $region15: #{mlp_forward.4} parent=11 // pred_region
        _
      $region16: #{mlp_forward.4} parent=11 // pred_fallthru
        _
    $region12: #{mlp_forward.4} parent=5 // pred_fallthru
      _
    %p117 = scmp.lt.s32.totalorder %s10, 2
    // Predicated region
    $region17: #{mlp_forward.4} parent=5 // pred_check
      %p118 = pneg %p117
    $region18: #{mlp_forward.4} parent=5 // pred_check_branch
      %120 = sbr.rel (%p118) target = $region20
    $region19: #{mlp_forward.4} parent=5 // pred_region
      // Predicated region
      $region21: #{mlp_forward.4} parent=19 // pred_check
        %p121 = pneg %p30
      $region22: #{mlp_forward.4} parent=19 // pred_check_branch
        %123 = sbr.rel (%p121) target = $region24
      $region23: #{mlp_forward.4} parent=19 // pred_region
        %s124 = smul.u32 32, %s10
        %p125 = scmp.lt.s32.totalorder %s124, 63
        %s126 = scalar_select %p125, %s124, 63
        %s127 = smul.addr %s126, 8
        %s128 = scalar_lea.vmem %s0, %s127
        %s129 = smul.u32 32, %s10
      $region24: #{mlp_forward.4} parent=19 // pred_fallthru
        _
    $region20: #{mlp_forward.4} parent=5 // pred_fallthru
      _
    %p130 = scmp.le.s32.totalorder 1, %s10
    %p131 = scmp.lt.s32.totalorder %s10, 3
    %p132 = pnand %p130, %p131
    %p133 = pneg %p132
    // Predicated region
    $region25: #{mlp_forward.4} parent=5 // pred_check
      _
    $region26: #{mlp_forward.4} parent=5 // pred_check_branch
      %135 = sbr.rel (%p132) target = $region28
    $region27: #{mlp_forward.4} parent=5 // pred_region
      %s136 = ssub.s32 %s10, 1
      %s137 = smul.u32 32, %s15
      %p138 = scmp.lt.s32.totalorder %s137, 63
      %s139 = scalar_select %p138, %s137, 63
      %s140 = smul.addr %s139, 8
      %s141 = scalar_lea.vmem %s0, %s140
      %p142 = pneg %p36
      %p143 = pneg %p33
      %p144 = pneg %p57
      %p145 = pneg %p54
      %p146 = pneg %p78
      %p147 = pneg %p75
      %p148 = pneg %p99
      %p149 = pneg %p96
      %s150 = smul.u32 32, %s15
      %p151 = scmp.lt.s32.totalorder %s150, 63
      %s152 = scalar_select %p151, %s150, 63
      %s153 = smul.addr %s152, 8
      %s154 = scalar_lea.vmem %s0, %s153
      %s155 = smul.u32 32, %s15
      %p156 = scmp.eq.s32.totalorder %s15, 0
      // Predicated region
      $region29: #{mlp_forward.4} parent=27 // pred_check
        %p157 = pneg %p156
      $region30: #{mlp_forward.4} parent=27 // pred_check_branch
        %159 = sbr.rel (%p157) target = $region32
      $region31: #{mlp_forward.4} parent=27 // pred_region
        %vm160 = vcmask 253952
        %161 = vst.msk [vmem:[%s2] sm:$0x1] %vm160, 0.0
        %162 = vst.msk [vmem:[%s3] sm:$0x1] %vm160, 0.0
      $region32: #{mlp_forward.4} parent=27 // pred_fallthru
        _
      %v163 = vld [vmem:[%s154] sm:$0xff]
      %v164 = vld [vmem:[%s154 + $0x8] sm:$0xff]
      %v165 = vld [vmem:[%s154 + $0x10] sm:$0xff]
      %v166 = vld [vmem:[%s154 + $0x18] sm:$0xff]
      %v167 = vld [vmem:[%s154 + $0x20] sm:$0xff]
      %v168 = vld [vmem:[%s154 + $0x28] sm:$0xff]
      %v169 = vld [vmem:[%s154 + $0x30] sm:$0xff]
      %v170 = vld [vmem:[%s154 + $0x38] sm:$0xff]
      %v171 = vld [vmem:[%s154 + $0x40] sm:$0xff]
      %v172 = vld [vmem:[%s154 + $0x48] sm:$0xff]
      %v173 = vld [vmem:[%s154 + $0x50] sm:$0xff]
      %v174 = vld [vmem:[%s154 + $0x58] sm:$0xff]
      %v175 = vld [vmem:[%s154 + $0x60] sm:$0xff]
      %v176 = vld [vmem:[%s154 + $0x68] sm:$0xff]
      %v177 = vld [vmem:[%s154 + $0x70] sm:$0xff]
      %v178 = vld [vmem:[%s154 + $0x78] sm:$0xff]
      %v179 = vld [vmem:[%s154 + $0x80] sm:$0xff]
      %v180 = vld [vmem:[%s154 + $0x88] sm:$0xff]
      %v181 = vld [vmem:[%s154 + $0x90] sm:$0xff]
      %v182 = vld [vmem:[%s154 + $0x98] sm:$0xff]
      %v183 = vld [vmem:[%s154 + $0xa0] sm:$0xff]
      %v184 = vld [vmem:[%s154 + $0xa8] sm:$0xff]
      %v185 = vld [vmem:[%s154 + $0xb0] sm:$0xff]
      %v186 = vld [vmem:[%s154 + $0xb8] sm:$0xff]
      %v187 = vld [vmem:[%s154 + $0xc0] sm:$0xff]
      %v188 = vld [vmem:[%s154 + $0xc8] sm:$0xff]
      %v189 = vld [vmem:[%s154 + $0xd0] sm:$0xff]
      %v190 = vld [vmem:[%s154 + $0xd8] sm:$0xff]
      %v191 = vld [vmem:[%s154 + $0xe0] sm:$0xff]
      %v192 = vld [vmem:[%s154 + $0xe8] sm:$0xff]
      %v193 = vld [vmem:[%s154 + $0xf0] sm:$0xff]
      %v194 = vld [vmem:[%s154 + $0xf8] sm:$0xff]
      %v195 = vld [vmem:[%s1] sm:$0xf]
      %vm196 = vcmask 31744
      %v198 = vsel %vm196, %v163, 0
      %v201 = vsel %vm196, %v164, 0
      %v204 = vsel %vm196, %v165, 0
      %v207 = vsel %vm196, %v166, 0
      %v210 = vsel %vm196, %v167, 0
      %v213 = vsel %vm196, %v168, 0
      %v216 = vsel %vm196, %v169, 0
      %v219 = vsel %vm196, %v170, 0
      %v222 = vsel %vm196, %v171, 0
      %v225 = vsel %vm196, %v172, 0
      %v228 = vsel %vm196, %v173, 0
      %v231 = vsel %vm196, %v174, 0
      %v234 = vsel %vm196, %v175, 0
      %v237 = vsel %vm196, %v176, 0
      %v240 = vsel %vm196, %v177, 0
      %v243 = vsel %vm196, %v178, 0
      %v246 = vsel %vm196, %v179, 0
      %v249 = vsel %vm196, %v180, 0
      %v252 = vsel %vm196, %v181, 0
      %v255 = vsel %vm196, %v182, 0
      %v258 = vsel %vm196, %v183, 0
      %v261 = vsel %vm196, %v184, 0
      %v264 = vsel %vm196, %v185, 0
      %v267 = vsel %vm196, %v186, 0
      %v270 = vsel %vm196, %v187, 0
      %v273 = vsel %vm196, %v188, 0
      %v276 = vsel %vm196, %v189, 0
      %v279 = vsel %vm196, %v190, 0
      %v282 = vsel %vm196, %v191, 0
      %v285 = vsel %vm196, %v192, 0
      %v288 = vsel %vm196, %v193, 0
      %v291 = vsel %vm196, %v194, 0
      %vm293 = vcmask 1043456
      %v295 = vsel %vm293, %v195, 0
      %297 = vmatprep.subr.mxu0 0.0
      %298 = vmatpush1.msra.mxu0 0.0
      %299 = vmatprep.subr.mxu0 0.0
      %300 = vmatpush1.msra.mxu0 0.0
      %301 = vmatprep.subr.mxu0 0.0
      %302 = vmatpush1.msra.mxu0 0.0
      %303 = vmatprep.subr.mxu0 0.0
      %304 = vmatpush1.msra.mxu0 0.0
      %305 = vmatprep.subr.mxu0 0.0
      %306 = vmatpush1.msra.mxu0 0.0
      %307 = vmatprep.subr.mxu0 0.0
      %308 = vmatpush1.msra.mxu0 0.0
      %309 = vmatprep.subr.mxu0 0.0
      %310 = vmatpush1.msra.mxu0 0.0
      %311 = vmatprep.subr.mxu0 0.0
      %312 = vmatpush1.msra.mxu0 0.0
      %313 = vmatprep.subr.mxu0 0.0
      %314 = vmatpush1.msra.mxu0 0.0
      %315 = vmatprep.subr.mxu0 0.0
      %316 = vmatpush1.msra.mxu0 0.0
      %317 = vmatprep.subr.mxu0 0.0
      %318 = vmatpush1.msra.mxu0 0.0
      %319 = vmatprep.subr.mxu0 0.0
      %320 = vmatpush1.msra.mxu0 0.0
      %321 = vmatprep.subr.mxu0 0.0
      %322 = vmatpush1.msra.mxu0 0.0
      %323 = vmatprep.subr.mxu0 0.0
      %324 = vmatpush1.msra.mxu0 0.0
      %325 = vmatprep.subr.mxu0 0.0
      %326 = vmatpush1.msra.mxu0 0.0
      %327 = vmatprep.subr.mxu0 0.0
      %328 = vmatpush1.msra.mxu0 %v295
      %329 = vmatprep.subr.mxu0 0.0
      %330 = vmatpush2.msra.mxu0 0.0
      %331 = vmatprep.subr.mxu0 0.0
      %332 = vmatpush2.msra.mxu0 0.0
      %333 = vmatprep.subr.mxu0 0.0
      %334 = vmatpush2.msra.mxu0 0.0
      %335 = vmatprep.subr.mxu0 0.0
      %336 = vmatpush2.msra.mxu0 0.0
      %337 = vmatprep.subr.mxu0 0.0
      %338 = vmatpush2.msra.mxu0 0.0
      %339 = vmatprep.subr.mxu0 0.0
      %340 = vmatpush2.msra.mxu0 0.0
      %341 = vmatprep.subr.mxu0 0.0
      %342 = vmatpush2.msra.mxu0 0.0
      %343 = vmatprep.subr.mxu0 0.0
      %344 = vmatpush2.msra.mxu0 0.0
      %345 = vmatprep.subr.mxu0 0.0
      %346 = vmatpush2.msra.mxu0 0.0
      %347 = vmatprep.subr.mxu0 0.0
      %348 = vmatpush2.msra.mxu0 0.0
      %349 = vmatprep.subr.mxu0 0.0
      %350 = vmatpush2.msra.mxu0 0.0
      %351 = vmatprep.subr.mxu0 0.0
      %352 = vmatpush2.msra.mxu0 0.0
      %353 = vmatprep.subr.mxu0 0.0
      %354 = vmatpush2.msra.mxu0 0.0
      %355 = vmatprep.subr.mxu0 0.0
      %356 = vmatpush2.msra.mxu0 0.0
      %357 = vmatprep.subr.mxu0 0.0
      %358 = vmatpush2.msra.mxu0 0.0
      %359 = vmatprep.subr.mxu0 0.0
      %360 = vmatpush2.msra.mxu0 0.0
      %361 = vmatprep.mubr.f32.mxu0 0.0
      %362 = vmatmul.mubr.f32.gmra.mxu0 %v198
      %v363 = vpop.f32.mrf.mxu0
      %v364 = vadd.f32 0.0, %v363
      %v365 = vpop.f32.mrf.mxu0
      %366 = vmatprep.mubr.f32.mxu0 0.0
      %367 = vmatmul.mubr.f32.gmra.mxu0 %v201
      %v368 = vpop.f32.mrf.mxu0
      %v369 = vadd.f32 0.0, %v368
      %v370 = vpop.f32.mrf.mxu0
      %371 = vmatprep.mubr.f32.mxu0 0.0
      %372 = vmatmul.mubr.f32.gmra.mxu0 %v204
      %v373 = vpop.f32.mrf.mxu0
      %v374 = vadd.f32 0.0, %v373
      %v375 = vpop.f32.mrf.mxu0
      %376 = vmatprep.mubr.f32.mxu0 0.0
      %377 = vmatmul.mubr.f32.gmra.mxu0 %v207
      %v378 = vpop.f32.mrf.mxu0
      %v379 = vadd.f32 0.0, %v378
      %v380 = vpop.f32.mrf.mxu0
      %381 = vmatprep.mubr.f32.mxu0 0.0
      %382 = vmatmul.mubr.f32.gmra.mxu0 %v210
      %v383 = vpop.f32.mrf.mxu0
      %v384 = vadd.f32 0.0, %v383
      %v385 = vpop.f32.mrf.mxu0
      %386 = vmatprep.mubr.f32.mxu0 0.0
      %387 = vmatmul.mubr.f32.gmra.mxu0 %v213
      %v388 = vpop.f32.mrf.mxu0
      %v389 = vadd.f32 0.0, %v388
      %v390 = vpop.f32.mrf.mxu0
      %391 = vmatprep.mubr.f32.mxu0 0.0
      %392 = vmatmul.mubr.f32.gmra.mxu0 %v216
      %v393 = vpop.f32.mrf.mxu0
      %v394 = vadd.f32 0.0, %v393
      %v395 = vpop.f32.mrf.mxu0
      %396 = vmatprep.mubr.f32.mxu0 0.0
      %397 = vmatmul.mubr.f32.gmra.mxu0 %v219
      %v398 = vpop.f32.mrf.mxu0
      %v399 = vadd.f32 0.0, %v398
      %v400 = vpop.f32.mrf.mxu0
      %401 = vmatprep.mubr.f32.mxu0 0.0
      %402 = vmatmul.mubr.f32.gmra.mxu0 %v222
      %v403 = vpop.f32.mrf.mxu0
      %v404 = vadd.f32 0.0, %v403
      %v405 = vpop.f32.mrf.mxu0
      %406 = vmatprep.mubr.f32.mxu0 0.0
      %407 = vmatmul.mubr.f32.gmra.mxu0 %v225
      %v408 = vpop.f32.mrf.mxu0
      %v409 = vadd.f32 0.0, %v408
      %v410 = vpop.f32.mrf.mxu0
      %411 = vmatprep.mubr.f32.mxu0 0.0
      %412 = vmatmul.mubr.f32.gmra.mxu0 %v228
      %v413 = vpop.f32.mrf.mxu0
      %v414 = vadd.f32 0.0, %v413
      %v415 = vpop.f32.mrf.mxu0
      %416 = vmatprep.mubr.f32.mxu0 0.0
      %417 = vmatmul.mubr.f32.gmra.mxu0 %v231
      %v418 = vpop.f32.mrf.mxu0
      %v419 = vadd.f32 0.0, %v418
      %v420 = vpop.f32.mrf.mxu0
      %421 = vmatprep.mubr.f32.mxu0 0.0
      %422 = vmatmul.mubr.f32.gmra.mxu0 %v234
      %v423 = vpop.f32.mrf.mxu0
      %v424 = vadd.f32 0.0, %v423
      %v425 = vpop.f32.mrf.mxu0
      %426 = vmatprep.mubr.f32.mxu0 0.0
      %427 = vmatmul.mubr.f32.gmra.mxu0 %v237
      %v428 = vpop.f32.mrf.mxu0
      %v429 = vadd.f32 0.0, %v428
      %v430 = vpop.f32.mrf.mxu0
      %431 = vmatprep.mubr.f32.mxu0 0.0
      %432 = vmatmul.mubr.f32.gmra.mxu0 %v240
      %v433 = vpop.f32.mrf.mxu0
      %v434 = vadd.f32 0.0, %v433
      %v435 = vpop.f32.mrf.mxu0
      %436 = vmatprep.mubr.f32.mxu0 0.0
      %437 = vmatmul.mubr.f32.gmra.mxu0 %v243
      %v438 = vpop.f32.mrf.mxu0
      %v439 = vadd.f32 0.0, %v438
      %v440 = vpop.f32.mrf.mxu0
      %441 = vmatprep.mubr.f32.mxu0 0.0
      %442 = vmatmul.mubr.f32.gmra.mxu0 %v246
      %v443 = vpop.f32.mrf.mxu0
      %v444 = vadd.f32 0.0, %v443
      %v445 = vpop.f32.mrf.mxu0
      %446 = vmatprep.mubr.f32.mxu0 0.0
      %447 = vmatmul.mubr.f32.gmra.mxu0 %v249
      %v448 = vpop.f32.mrf.mxu0
      %v449 = vadd.f32 0.0, %v448
      %v450 = vpop.f32.mrf.mxu0
      %451 = vmatprep.mubr.f32.mxu0 0.0
      %452 = vmatmul.mubr.f32.gmra.mxu0 %v252
      %v453 = vpop.f32.mrf.mxu0
      %v454 = vadd.f32 0.0, %v453
      %v455 = vpop.f32.mrf.mxu0
      %456 = vmatprep.mubr.f32.mxu0 0.0
      %457 = vmatmul.mubr.f32.gmra.mxu0 %v255
      %v458 = vpop.f32.mrf.mxu0
      %v459 = vadd.f32 0.0, %v458
      %v460 = vpop.f32.mrf.mxu0
      %461 = vmatprep.mubr.f32.mxu0 0.0
      %462 = vmatmul.mubr.f32.gmra.mxu0 %v258
      %v463 = vpop.f32.mrf.mxu0
      %v464 = vadd.f32 0.0, %v463
      %v465 = vpop.f32.mrf.mxu0
      %466 = vmatprep.mubr.f32.mxu0 0.0
      %467 = vmatmul.mubr.f32.gmra.mxu0 %v261
      %v468 = vpop.f32.mrf.mxu0
      %v469 = vadd.f32 0.0, %v468
      %v470 = vpop.f32.mrf.mxu0
      %471 = vmatprep.mubr.f32.mxu0 0.0
      %472 = vmatmul.mubr.f32.gmra.mxu0 %v264
      %v473 = vpop.f32.mrf.mxu0
      %v474 = vadd.f32 0.0, %v473
      %v475 = vpop.f32.mrf.mxu0
      %476 = vmatprep.mubr.f32.mxu0 0.0
      %477 = vmatmul.mubr.f32.gmra.mxu0 %v267
      %v478 = vpop.f32.mrf.mxu0
      %v479 = vadd.f32 0.0, %v478
      %v480 = vpop.f32.mrf.mxu0
      %481 = vmatprep.mubr.f32.mxu0 0.0
      %482 = vmatmul.mubr.f32.gmra.mxu0 %v270
      %v483 = vpop.f32.mrf.mxu0
      %v484 = vadd.f32 0.0, %v483
      %v485 = vpop.f32.mrf.mxu0
      %486 = vmatprep.mubr.f32.mxu0 0.0
      %487 = vmatmul.mubr.f32.gmra.mxu0 %v273
      %v488 = vpop.f32.mrf.mxu0
      %v489 = vadd.f32 0.0, %v488
      %v490 = vpop.f32.mrf.mxu0
      %491 = vmatprep.mubr.f32.mxu0 0.0
      %492 = vmatmul.mubr.f32.gmra.mxu0 %v276
      %v493 = vpop.f32.mrf.mxu0
      %v494 = vadd.f32 0.0, %v493
      %v495 = vpop.f32.mrf.mxu0
      %496 = vmatprep.mubr.f32.mxu0 0.0
      %497 = vmatmul.mubr.f32.gmra.mxu0 %v279
      %v498 = vpop.f32.mrf.mxu0
      %v499 = vadd.f32 0.0, %v498
      %v500 = vpop.f32.mrf.mxu0
      %501 = vmatprep.mubr.f32.mxu0 0.0
      %502 = vmatmul.mubr.f32.gmra.mxu0 %v282
      %v503 = vpop.f32.mrf.mxu0
      %v504 = vadd.f32 0.0, %v503
      %v505 = vpop.f32.mrf.mxu0
      %506 = vmatprep.mubr.f32.mxu0 0.0
      %507 = vmatmul.mubr.f32.gmra.mxu0 %v285
      %v508 = vpop.f32.mrf.mxu0
      %v509 = vadd.f32 0.0, %v508
      %v510 = vpop.f32.mrf.mxu0
      %511 = vmatprep.mubr.f32.mxu0 0.0
      %512 = vmatmul.mubr.f32.gmra.mxu0 %v288
      %v513 = vpop.f32.mrf.mxu0
      %v514 = vadd.f32 0.0, %v513
      %v515 = vpop.f32.mrf.mxu0
      %516 = vmatprep.mubr.f32.mxu0 0.0
      %517 = vmatmul.mubr.f32.gmra.mxu0 %v291
      %v518 = vpop.f32.mrf.mxu0
      %v519 = vadd.f32 0.0, %v518
      %v520 = vpop.f32.mrf.mxu0
      %521 = vdwg.mxu0
      %v522 = vld [vmem:[%s2] sm:$0x1]
      %523 = vmatprep.subr.mxu0 0.0
      %524 = vmatpush1.msra.mxu0 %v439
      %525 = vmatprep.subr.mxu0 0.0
      %526 = vmatpush1.msra.mxu0 %v434
      %527 = vmatprep.subr.mxu0 0.0
      %528 = vmatpush1.msra.mxu0 %v429
      %529 = vmatprep.subr.mxu0 0.0
      %530 = vmatpush1.msra.mxu0 %v424
      %531 = vmatprep.subr.mxu0 0.0
      %532 = vmatpush1.msra.mxu0 %v419
      %533 = vmatprep.subr.mxu0 0.0
      %534 = vmatpush1.msra.mxu0 %v414
      %535 = vmatprep.subr.mxu0 0.0
      %536 = vmatpush1.msra.mxu0 %v409
      %537 = vmatprep.subr.mxu0 0.0
      %538 = vmatpush1.msra.mxu0 %v404
      %539 = vmatprep.subr.mxu0 0.0
      %540 = vmatpush1.msra.mxu0 %v399
      %541 = vmatprep.subr.mxu0 0.0
      %542 = vmatpush1.msra.mxu0 %v394
      %543 = vmatprep.subr.mxu0 0.0
      %544 = vmatpush1.msra.mxu0 %v389
      %545 = vmatprep.subr.mxu0 0.0
      %546 = vmatpush1.msra.mxu0 %v384
      %547 = vmatprep.subr.mxu0 0.0
      %548 = vmatpush1.msra.mxu0 %v379
      %549 = vmatprep.subr.mxu0 0.0
      %550 = vmatpush1.msra.mxu0 %v374
      %551 = vmatprep.subr.mxu0 0.0
      %552 = vmatpush1.msra.mxu0 %v369
      %553 = vmatprep.subr.mxu0 0.0
      %554 = vmatpush1.msra.mxu0 %v364
      %555 = vmatprep.subr.mxu0 0.0
      %556 = vmatpush2.msra.mxu0 %v519
      %557 = vmatprep.subr.mxu0 0.0
      %558 = vmatpush2.msra.mxu0 %v514
      %559 = vmatprep.subr.mxu0 0.0
      %560 = vmatpush2.msra.mxu0 %v509
      %561 = vmatprep.subr.mxu0 0.0
      %562 = vmatpush2.msra.mxu0 %v504
      %563 = vmatprep.subr.mxu0 0.0
      %564 = vmatpush2.msra.mxu0 %v499
      %565 = vmatprep.subr.mxu0 0.0
      %566 = vmatpush2.msra.mxu0 %v494
      %567 = vmatprep.subr.mxu0 0.0
      %568 = vmatpush2.msra.mxu0 %v489
      %569 = vmatprep.subr.mxu0 0.0
      %570 = vmatpush2.msra.mxu0 %v484
      %571 = vmatprep.subr.mxu0 0.0
      %572 = vmatpush2.msra.mxu0 %v479
      %573 = vmatprep.subr.mxu0 0.0
      %574 = vmatpush2.msra.mxu0 %v474
      %575 = vmatprep.subr.mxu0 0.0
      %576 = vmatpush2.msra.mxu0 %v469
      %577 = vmatprep.subr.mxu0 0.0
      %578 = vmatpush2.msra.mxu0 %v464
      %579 = vmatprep.subr.mxu0 0.0
      %580 = vmatpush2.msra.mxu0 %v459
      %581 = vmatprep.subr.mxu0 0.0
      %582 = vmatpush2.msra.mxu0 %v454
      %583 = vmatprep.subr.mxu0 0.0
      %584 = vmatpush2.msra.mxu0 %v449
      %585 = vmatprep.subr.mxu0 0.0
      %586 = vmatpush2.msra.mxu0 %v444
      %587 = vmatprep.mubr.f32.mxu0 1.0
      %588 = vmatmul.mubr.f32.gmra.mxu0 1.0
      %v589 = vpop.f32.mrf.mxu0
      %v590 = vadd.f32 0.0, %v589
      %v591 = vpop.f32.mrf.mxu0
      %592 = vdwg.mxu0
      %v593 = vadd.f32 %v522, %v590
      %vm594 = vcmask 253952
      %595 = vst.msk [vmem:[%s2] sm:$0x1] %vm594, %v593
      %v596 = vld [vmem:[%s3] sm:$0x1]
      %v597 = vmul.f32 %v364, %v364
      %v598 = vmul.f32 %v369, %v369
      %v599 = vmul.f32 %v374, %v374
      %v600 = vmul.f32 %v379, %v379
      %v601 = vmul.f32 %v384, %v384
      %v602 = vmul.f32 %v389, %v389
      %v603 = vmul.f32 %v394, %v394
      %v604 = vmul.f32 %v399, %v399
      %v605 = vmul.f32 %v404, %v404
      %v606 = vmul.f32 %v409, %v409
      %v607 = vmul.f32 %v414, %v414
      %v608 = vmul.f32 %v419, %v419
      %v609 = vmul.f32 %v424, %v424
      %v610 = vmul.f32 %v429, %v429
      %v611 = vmul.f32 %v434, %v434
      %v612 = vmul.f32 %v439, %v439
      %v613 = vmul.f32 %v444, %v444
      %v614 = vmul.f32 %v449, %v449
      %v615 = vmul.f32 %v454, %v454
      %v616 = vmul.f32 %v459, %v459
      %v617 = vmul.f32 %v464, %v464
      %v618 = vmul.f32 %v469, %v469
      %v619 = vmul.f32 %v474, %v474
      %v620 = vmul.f32 %v479, %v479
      %v621 = vmul.f32 %v484, %v484
      %v622 = vmul.f32 %v489, %v489
      %v623 = vmul.f32 %v494, %v494
      %v624 = vmul.f32 %v499, %v499
      %v625 = vmul.f32 %v504, %v504
      %v626 = vmul.f32 %v509, %v509
      %v627 = vmul.f32 %v514, %v514
      %v628 = vmul.f32 %v519, %v519
      %629 = vmatprep.subr.mxu0 0.0
      %630 = vmatpush1.msra.mxu0 %v612
      %631 = vmatprep.subr.mxu0 0.0
      %632 = vmatpush1.msra.mxu0 %v611
      %633 = vmatprep.subr.mxu0 0.0
      %634 = vmatpush1.msra.mxu0 %v610
      %635 = vmatprep.subr.mxu0 0.0
      %636 = vmatpush1.msra.mxu0 %v609
      %637 = vmatprep.subr.mxu0 0.0
      %638 = vmatpush1.msra.mxu0 %v608
      %639 = vmatprep.subr.mxu0 0.0
      %640 = vmatpush1.msra.mxu0 %v607
      %641 = vmatprep.subr.mxu0 0.0
      %642 = vmatpush1.msra.mxu0 %v606
      %643 = vmatprep.subr.mxu0 0.0
      %644 = vmatpush1.msra.mxu0 %v605
      %645 = vmatprep.subr.mxu0 0.0
      %646 = vmatpush1.msra.mxu0 %v604
      %647 = vmatprep.subr.mxu0 0.0
      %648 = vmatpush1.msra.mxu0 %v603
      %649 = vmatprep.subr.mxu0 0.0
      %650 = vmatpush1.msra.mxu0 %v602
      %651 = vmatprep.subr.mxu0 0.0
      %652 = vmatpush1.msra.mxu0 %v601
      %653 = vmatprep.subr.mxu0 0.0
      %654 = vmatpush1.msra.mxu0 %v600
      %655 = vmatprep.subr.mxu0 0.0
      %656 = vmatpush1.msra.mxu0 %v599
      %657 = vmatprep.subr.mxu0 0.0
      %658 = vmatpush1.msra.mxu0 %v598
      %659 = vmatprep.subr.mxu0 0.0
      %660 = vmatpush1.msra.mxu0 %v597
      %661 = vmatprep.subr.mxu0 0.0
      %662 = vmatpush2.msra.mxu0 %v628
      %663 = vmatprep.subr.mxu0 0.0
      %664 = vmatpush2.msra.mxu0 %v627
      %665 = vmatprep.subr.mxu0 0.0
      %666 = vmatpush2.msra.mxu0 %v626
      %667 = vmatprep.subr.mxu0 0.0
      %668 = vmatpush2.msra.mxu0 %v625
      %669 = vmatprep.subr.mxu0 0.0
      %670 = vmatpush2.msra.mxu0 %v624
      %671 = vmatprep.subr.mxu0 0.0
      %672 = vmatpush2.msra.mxu0 %v623
      %673 = vmatprep.subr.mxu0 0.0
      %674 = vmatpush2.msra.mxu0 %v622
      %675 = vmatprep.subr.mxu0 0.0
      %676 = vmatpush2.msra.mxu0 %v621
      %677 = vmatprep.subr.mxu0 0.0
      %678 = vmatpush2.msra.mxu0 %v620
      %679 = vmatprep.subr.mxu0 0.0
      %680 = vmatpush2.msra.mxu0 %v619
      %681 = vmatprep.subr.mxu0 0.0
      %682 = vmatpush2.msra.mxu0 %v618
      %683 = vmatprep.subr.mxu0 0.0
      %684 = vmatpush2.msra.mxu0 %v617
      %685 = vmatprep.subr.mxu0 0.0
      %686 = vmatpush2.msra.mxu0 %v616
      %687 = vmatprep.subr.mxu0 0.0
      %688 = vmatpush2.msra.mxu0 %v615
      %689 = vmatprep.subr.mxu0 0.0
      %690 = vmatpush2.msra.mxu0 %v614
      %691 = vmatprep.subr.mxu0 0.0
      %692 = vmatpush2.msra.mxu0 %v613
      %693 = vmatprep.mubr.f32.mxu0 1.0
      %694 = vmatmul.mubr.f32.gmra.mxu0 1.0
      %v695 = vpop.f32.mrf.mxu0
      %v696 = vadd.f32 0.0, %v695
      %v697 = vpop.f32.mrf.mxu0
      %698 = vdwg.mxu0
      %v699 = vadd.f32 %v596, %v696
      %700 = vst.msk [vmem:[%s3] sm:$0x1] %vm594, %v699
      // Predicated region
      $region33: #{mlp_forward.4} parent=27 // pred_check
        %p701 = pneg %p75
      $region34: #{mlp_forward.4} parent=27 // pred_check_branch
        %703 = sbr.rel (%p701) target = $region36
      $region35: #{mlp_forward.4} parent=27 // pred_region
        _
      $region36: #{mlp_forward.4} parent=27 // pred_fallthru
        _
      // Predicated region
      $region37: #{mlp_forward.4} parent=27 // pred_check
        %p704 = pneg %p96
      $region38: #{mlp_forward.4} parent=27 // pred_check_branch
        %706 = sbr.rel (%p704) target = $region40
      $region39: #{mlp_forward.4} parent=27 // pred_region
        _
      $region40: #{mlp_forward.4} parent=27 // pred_fallthru
        _
      // Predicated region
      $region41: #{mlp_forward.4} parent=27 // pred_check
        %p707 = pneg %p75
      $region42: #{mlp_forward.4} parent=27 // pred_check_branch
        %709 = sbr.rel (%p707) target = $region44
      $region43: #{mlp_forward.4} parent=27 // pred_region
        _
      $region44: #{mlp_forward.4} parent=27 // pred_fallthru
        _
      // Predicated region
      $region45: #{mlp_forward.4} parent=27 // pred_check
        %p710 = pneg %p96
      $region46: #{mlp_forward.4} parent=27 // pred_check_branch
        %712 = sbr.rel (%p710) target = $region48
      $region47: #{mlp_forward.4} parent=27 // pred_region
        _
      $region48: #{mlp_forward.4} parent=27 // pred_fallthru
        _
    $region28: #{mlp_forward.4} parent=5 // pred_fallthru
      _
    %p713 = scmp.le.s32.totalorder 2, %s10
    // Predicated region
    $region49: #{mlp_forward.4} parent=5 // pred_check
      %p714 = pneg %p713
    $region50: #{mlp_forward.4} parent=5 // pred_check_branch
      %716 = sbr.rel (%p714) target = $region52
    $region51: #{mlp_forward.4} parent=5 // pred_region
      %s717 = ssub.s32 %s10, 2
    $region52: #{mlp_forward.4} parent=5 // pred_fallthru
      _
  $region6: #{mlp_forward.4} parent=0 // loop_footer
    %s14 = sadd.s32 1, %s10
  $region7: #{mlp_forward.4} parent=0 // loop_footer_branch
    %9 = sbr.rel target = $region3
  $region8: #{mlp_forward.4} parent=0 // loop_exit
    _

// kernel: mlp_forward.6
$region0: #{mlp_forward.6}
  #allocation0 [shape = 'u32[]', space=smem, size = 0x4, offset = 0x4, fixed_abs, tag = 'smem constant byte address 0x4 - core index']
  #allocation1 [shape = 'u32[144,128]{1,0:T(1,128)}', space=vmem, size = 0x12000, scoped, tag = 'internal scratch']
  %s0 = inlined_call_operand.vmem [shape: f32[512,32], index: 0, kind: input, shape index: {}]
  %s1 = inlined_call_operand.vmem [shape: f32[32,16], index: 1, kind: input, shape index: {}]
  %s2 = inlined_call_operand.vmem [shape: f32[1,16], index: 2, kind: output, shape index: {0}]
  %s3 = inlined_call_operand.vmem [shape: f32[1,16], index: 3, kind: output, shape index: {1}]
  %4 = xla_tuple %s2, %s3
  %s5 = sld [smem:[#allocation0]]
  $region53: #{mlp_forward.6} parent=0
    _
  %s7 = ssub.s32 1, %s5
  %s8 = scalar_select 0, %s7, %s5
  loop: start=0, step=1, limit=4
  $region2: #{mlp_forward.6} parent=0 // loop_pre_header
    _
  $region3: #{mlp_forward.6} parent=0 // loop_header
    %s10 = sphi 0, %s14
    %p11 = scmp.ge.s32.totalorder %s10, 4
    %s20 = sphi 0, %s22
    %s23 = sphi 0, %s20
    %s24 = sphi 0, %s23
    %s40 = sphi 0, %s24
    %s44 = sphi 0, %s44
    %s46 = sphi 0, %s44
    %s47 = sphi 0, %s46
    %s61 = sphi 0, %s47
    %s65 = sphi 0, %s65
    %s67 = sphi 0, %s65
    %s68 = sphi 0, %s67
    %s82 = sphi 0, %s68
    %s86 = sphi 0, %s86
    %s88 = sphi 0, %s86
    %s89 = sphi 0, %s88
    %s103 = sphi 0, %s89
  $region4: #{mlp_forward.6} parent=0 // loop_header_branch
    %13 = sbr.rel (%p11) target = $region8
  $region5: #{mlp_forward.6} parent=0 // loop_body
    %s15 = ssub.s32 %s10, 1
    %s16 = ssub.s32 %s10, 2
    %s17 = sadd.s32 %s10, 1
    %s18 = ssub.s32 %s10, %s17
    %p19 = scmp.eq.s32.totalorder %s18, 0
    %s21 = sadd.s32 %s20, 1
    %s22 = scalar_select %p19, %s20, %s21
    %p25 = pneg %p19
    %p26 = scmp.eq.s32.totalorder %s10, 1
    %p27 = por %p25, %p26
    %p28 = scmp.ne.s32.totalorder %s20, %s23
    %p29 = scmp.eq.s32.totalorder %s10, 0
    %p30 = por %p28, %p29
    %p31 = scmp.ne.s32.totalorder %s20, %s23
    %p32 = scmp.eq.s32.totalorder %s15, 1
    %p33 = por %p31, %p32
    %p34 = scmp.ne.s32.totalorder %s23, %s24
    %p35 = scmp.eq.s32.totalorder %s15, 0
    %p36 = por %p34, %p35
    %p37 = scmp.ne.s32.totalorder %s23, %s24
    %p38 = scmp.eq.s32.totalorder %s16, 1
    %p39 = por %p37, %p38
    %p41 = scmp.ne.s32.totalorder %s24, %s40
    %p42 = scmp.eq.s32.totalorder %s16, 0
    %p43 = por %p41, %p42
    %s45 = sadd.s32 %s44, 1
    %p48 = scmp.eq.s32.totalorder %s10, 1
    %p49 = scmp.ne.s32.totalorder %s44, %s46
    %p50 = scmp.eq.s32.totalorder %s10, 0
    %p51 = por %p49, %p50
    %p52 = scmp.ne.s32.totalorder %s44, %s46
    %p53 = scmp.eq.s32.totalorder %s15, 1
    %p54 = por %p52, %p53
    %p55 = scmp.ne.s32.totalorder %s46, %s47
    %p56 = scmp.eq.s32.totalorder %s15, 0
    %p57 = por %p55, %p56
    %p58 = scmp.ne.s32.totalorder %s46, %s47
    %p59 = scmp.eq.s32.totalorder %s16, 1
    %p60 = por %p58, %p59
    %p62 = scmp.ne.s32.totalorder %s47, %s61
    %p63 = scmp.eq.s32.totalorder %s16, 0
    %p64 = por %p62, %p63
    %s66 = sadd.s32 %s65, 1
    %p69 = scmp.eq.s32.totalorder %s10, 1
    %p70 = scmp.ne.s32.totalorder %s65, %s67
    %p71 = scmp.eq.s32.totalorder %s10, 0
    %p72 = por %p70, %p71
    %p73 = scmp.ne.s32.totalorder %s65, %s67
    %p74 = scmp.eq.s32.totalorder %s15, 1
    %p75 = por %p73, %p74
    %p76 = scmp.ne.s32.totalorder %s67, %s68
    %p77 = scmp.eq.s32.totalorder %s15, 0
    %p78 = por %p76, %p77
    %p79 = scmp.ne.s32.totalorder %s67, %s68
    %p80 = scmp.eq.s32.totalorder %s16, 1
    %p81 = por %p79, %p80
    %p83 = scmp.ne.s32.totalorder %s68, %s82
    %p84 = scmp.eq.s32.totalorder %s16, 0
    %p85 = por %p83, %p84
    %s87 = sadd.s32 %s86, 1
    %p90 = scmp.eq.s32.totalorder %s10, 1
    %p91 = scmp.ne.s32.totalorder %s86, %s88
    %p92 = scmp.eq.s32.totalorder %s10, 0
    %p93 = por %p91, %p92
    %p94 = scmp.ne.s32.totalorder %s86, %s88
    %p95 = scmp.eq.s32.totalorder %s15, 1
    %p96 = por %p94, %p95
    %p97 = scmp.ne.s32.totalorder %s88, %s89
    %p98 = scmp.eq.s32.totalorder %s15, 0
    %p99 = por %p97, %p98
    %p100 = scmp.ne.s32.totalorder %s88, %s89
    %p101 = scmp.eq.s32.totalorder %s16, 1
    %p102 = por %p100, %p101
    %p104 = scmp.ne.s32.totalorder %s89, %s103
    %p105 = scmp.eq.s32.totalorder %s16, 0
    %p106 = por %p104, %p105
    %p107 = scmp.le.s32.totalorder 1, %s10
    %p108 = scmp.lt.s32.totalorder %s10, 3
    %p109 = pnand %p107, %p108
    %p110 = pneg %p109
    // Predicated region
    $region9: #{mlp_forward.6} parent=5 // pred_check
      _
    $region10: #{mlp_forward.6} parent=5 // pred_check_branch
      %112 = sbr.rel (%p109) target = $region12
    $region11: #{mlp_forward.6} parent=5 // pred_region
      %s113 = ssub.s32 %s10, 1
      // Predicated region
      $region13: #{mlp_forward.6} parent=11 // pred_check
        %p114 = pneg %p57
      $region14: #{mlp_forward.6} parent=11 // pred_check_branch
        %116 = sbr.rel (%p114) target = $region16
      $region15: #{mlp_forward.6} parent=11 // pred_region
        _
      $region16: #{mlp_forward.6} parent=11 // pred_fallthru
        _
    $region12: #{mlp_forward.6} parent=5 // pred_fallthru
      _
    %p117 = scmp.lt.s32.totalorder %s10, 2
    // Predicated region
    $region17: #{mlp_forward.6} parent=5 // pred_check
      %p118 = pneg %p117
    $region18: #{mlp_forward.6} parent=5 // pred_check_branch
      %120 = sbr.rel (%p118) target = $region20
    $region19: #{mlp_forward.6} parent=5 // pred_region
      // Predicated region
      $region21: #{mlp_forward.6} parent=19 // pred_check
        %p121 = pneg %p30
      $region22: #{mlp_forward.6} parent=19 // pred_check_branch
        %123 = sbr.rel (%p121) target = $region24
      $region23: #{mlp_forward.6} parent=19 // pred_region
        %s124 = smul.u32 32, %s10
        %p125 = scmp.lt.s32.totalorder %s124, 63
        %s126 = scalar_select %p125, %s124, 63
        %s127 = smul.addr %s126, 8
        %s128 = scalar_lea.vmem %s0, %s127
        %s129 = smul.u32 32, %s10
      $region24: #{mlp_forward.6} parent=19 // pred_fallthru
        _
    $region20: #{mlp_forward.6} parent=5 // pred_fallthru
      _
    %p130 = scmp.le.s32.totalorder 1, %s10
    %p131 = scmp.lt.s32.totalorder %s10, 3
    %p132 = pnand %p130, %p131
    %p133 = pneg %p132
    // Predicated region
    $region25: #{mlp_forward.6} parent=5 // pred_check
      _
    $region26: #{mlp_forward.6} parent=5 // pred_check_branch
      %135 = sbr.rel (%p132) target = $region28
    $region27: #{mlp_forward.6} parent=5 // pred_region
      %s136 = ssub.s32 %s10, 1
      %s137 = smul.u32 32, %s15
      %p138 = scmp.lt.s32.totalorder %s137, 63
      %s139 = scalar_select %p138, %s137, 63
      %s140 = smul.addr %s139, 8
      %s141 = scalar_lea.vmem %s0, %s140
      %p142 = pneg %p36
      %p143 = pneg %p33
      %p144 = pneg %p57
      %p145 = pneg %p54
      %p146 = pneg %p78
      %p147 = pneg %p75
      %p148 = pneg %p99
      %p149 = pneg %p96
      %s150 = smul.u32 32, %s15
      %p151 = scmp.lt.s32.totalorder %s150, 63
      %s152 = scalar_select %p151, %s150, 63
      %s153 = smul.addr %s152, 8
      %s154 = scalar_lea.vmem %s0, %s153
      %s155 = smul.u32 32, %s15
      %p156 = scmp.eq.s32.totalorder %s15, 0
      // Predicated region
      $region29: #{mlp_forward.6} parent=27 // pred_check
        %p157 = pneg %p156
      $region30: #{mlp_forward.6} parent=27 // pred_check_branch
        %159 = sbr.rel (%p157) target = $region32
      $region31: #{mlp_forward.6} parent=27 // pred_region
        %vm160 = vcmask 122880
        %161 = vst.msk [vmem:[%s2] sm:$0x1] %vm160, 0.0
        %162 = vst.msk [vmem:[%s3] sm:$0x1] %vm160, 0.0
      $region32: #{mlp_forward.6} parent=27 // pred_fallthru
        _
      %v163 = vld [vmem:[%s154] sm:$0xff]
      %v164 = vld [vmem:[%s154 + $0x8] sm:$0xff]
      %v165 = vld [vmem:[%s154 + $0x10] sm:$0xff]
      %v166 = vld [vmem:[%s154 + $0x18] sm:$0xff]
      %v167 = vld [vmem:[%s154 + $0x20] sm:$0xff]
      %v168 = vld [vmem:[%s154 + $0x28] sm:$0xff]
      %v169 = vld [vmem:[%s154 + $0x30] sm:$0xff]
      %v170 = vld [vmem:[%s154 + $0x38] sm:$0xff]
      %v171 = vld [vmem:[%s154 + $0x40] sm:$0xff]
      %v172 = vld [vmem:[%s154 + $0x48] sm:$0xff]
      %v173 = vld [vmem:[%s154 + $0x50] sm:$0xff]
      %v174 = vld [vmem:[%s154 + $0x58] sm:$0xff]
      %v175 = vld [vmem:[%s154 + $0x60] sm:$0xff]
      %v176 = vld [vmem:[%s154 + $0x68] sm:$0xff]
      %v177 = vld [vmem:[%s154 + $0x70] sm:$0xff]
      %v178 = vld [vmem:[%s154 + $0x78] sm:$0xff]
      %v179 = vld [vmem:[%s154 + $0x80] sm:$0xff]
      %v180 = vld [vmem:[%s154 + $0x88] sm:$0xff]
      %v181 = vld [vmem:[%s154 + $0x90] sm:$0xff]
      %v182 = vld [vmem:[%s154 + $0x98] sm:$0xff]
      %v183 = vld [vmem:[%s154 + $0xa0] sm:$0xff]
      %v184 = vld [vmem:[%s154 + $0xa8] sm:$0xff]
      %v185 = vld [vmem:[%s154 + $0xb0] sm:$0xff]
      %v186 = vld [vmem:[%s154 + $0xb8] sm:$0xff]
      %v187 = vld [vmem:[%s154 + $0xc0] sm:$0xff]
      %v188 = vld [vmem:[%s154 + $0xc8] sm:$0xff]
      %v189 = vld [vmem:[%s154 + $0xd0] sm:$0xff]
      %v190 = vld [vmem:[%s154 + $0xd8] sm:$0xff]
      %v191 = vld [vmem:[%s154 + $0xe0] sm:$0xff]
      %v192 = vld [vmem:[%s154 + $0xe8] sm:$0xff]
      %v193 = vld [vmem:[%s154 + $0xf0] sm:$0xff]
      %v194 = vld [vmem:[%s154 + $0xf8] sm:$0xff]
      %v195 = vld [vmem:[%s1] sm:$0xff]
      %v196 = vld [vmem:[%s1 + $0x8] sm:$0xff]
      %v197 = vld [vmem:[%s1 + $0x10] sm:$0xff]
      %v198 = vld [vmem:[%s1 + $0x18] sm:$0xff]
      %vm199 = vcmask 261120
      %v201 = vsel %vm199, %v163, 0
      %v204 = vsel %vm199, %v164, 0
      %v207 = vsel %vm199, %v165, 0
      %v210 = vsel %vm199, %v166, 0
      %v213 = vsel %vm199, %v167, 0
      %v216 = vsel %vm199, %v168, 0
      %v219 = vsel %vm199, %v169, 0
      %v222 = vsel %vm199, %v170, 0
      %v225 = vsel %vm199, %v171, 0
      %v228 = vsel %vm199, %v172, 0
      %v231 = vsel %vm199, %v173, 0
      %v234 = vsel %vm199, %v174, 0
      %v237 = vsel %vm199, %v175, 0
      %v240 = vsel %vm199, %v176, 0
      %v243 = vsel %vm199, %v177, 0
      %v246 = vsel %vm199, %v178, 0
      %v249 = vsel %vm199, %v179, 0
      %v252 = vsel %vm199, %v180, 0
      %v255 = vsel %vm199, %v181, 0
      %v258 = vsel %vm199, %v182, 0
      %v261 = vsel %vm199, %v183, 0
      %v264 = vsel %vm199, %v184, 0
      %v267 = vsel %vm199, %v185, 0
      %v270 = vsel %vm199, %v186, 0
      %v273 = vsel %vm199, %v187, 0
      %v276 = vsel %vm199, %v188, 0
      %v279 = vsel %vm199, %v189, 0
      %v282 = vsel %vm199, %v190, 0
      %v285 = vsel %vm199, %v191, 0
      %v288 = vsel %vm199, %v192, 0
      %v291 = vsel %vm199, %v193, 0
      %v294 = vsel %vm199, %v194, 0
      %296 = vmatprep.subr.mxu0 0.0
      %297 = vmatpush1.msra.mxu0 0.0
      %298 = vmatprep.subr.mxu0 0.0
      %299 = vmatpush1.msra.mxu0 0.0
      %300 = vmatprep.subr.mxu0 0.0
      %301 = vmatpush1.msra.mxu0 0.0
      %302 = vmatprep.subr.mxu0 0.0
      %303 = vmatpush1.msra.mxu0 0.0
      %304 = vmatprep.subr.mxu0 0.0
      %305 = vmatpush1.msra.mxu0 0.0
      %306 = vmatprep.subr.mxu0 0.0
      %307 = vmatpush1.msra.mxu0 0.0
      %308 = vmatprep.subr.mxu0 0.0
      %309 = vmatpush1.msra.mxu0 0.0
      %310 = vmatprep.subr.mxu0 0.0
      %311 = vmatpush1.msra.mxu0 0.0
      %312 = vmatprep.subr.mxu0 0.0
      %313 = vmatpush1.msra.mxu0 0.0
      %314 = vmatprep.subr.mxu0 0.0
      %315 = vmatpush1.msra.mxu0 0.0
      %316 = vmatprep.subr.mxu0 0.0
      %317 = vmatpush1.msra.mxu0 0.0
      %318 = vmatprep.subr.mxu0 0.0
      %319 = vmatpush1.msra.mxu0 0.0
      %320 = vmatprep.subr.mxu0 0.0
      %321 = vmatpush1.msra.mxu0 %v198
      %322 = vmatprep.subr.mxu0 0.0
      %323 = vmatpush1.msra.mxu0 %v197
      %324 = vmatprep.subr.mxu0 0.0
      %325 = vmatpush1.msra.mxu0 %v196
      %326 = vmatprep.subr.mxu0 0.0
      %327 = vmatpush1.msra.mxu0 %v195
      %328 = vmatprep.subr.mxu0 0.0
      %329 = vmatpush2.msra.mxu0 0.0
      %330 = vmatprep.subr.mxu0 0.0
      %331 = vmatpush2.msra.mxu0 0.0
      %332 = vmatprep.subr.mxu0 0.0
      %333 = vmatpush2.msra.mxu0 0.0
      %334 = vmatprep.subr.mxu0 0.0
      %335 = vmatpush2.msra.mxu0 0.0
      %336 = vmatprep.subr.mxu0 0.0
      %337 = vmatpush2.msra.mxu0 0.0
      %338 = vmatprep.subr.mxu0 0.0
      %339 = vmatpush2.msra.mxu0 0.0
      %340 = vmatprep.subr.mxu0 0.0
      %341 = vmatpush2.msra.mxu0 0.0
      %342 = vmatprep.subr.mxu0 0.0
      %343 = vmatpush2.msra.mxu0 0.0
      %344 = vmatprep.subr.mxu0 0.0
      %345 = vmatpush2.msra.mxu0 0.0
      %346 = vmatprep.subr.mxu0 0.0
      %347 = vmatpush2.msra.mxu0 0.0
      %348 = vmatprep.subr.mxu0 0.0
      %349 = vmatpush2.msra.mxu0 0.0
      %350 = vmatprep.subr.mxu0 0.0
      %351 = vmatpush2.msra.mxu0 0.0
      %352 = vmatprep.subr.mxu0 0.0
      %353 = vmatpush2.msra.mxu0 0.0
      %354 = vmatprep.subr.mxu0 0.0
      %355 = vmatpush2.msra.mxu0 0.0
      %356 = vmatprep.subr.mxu0 0.0
      %357 = vmatpush2.msra.mxu0 0.0
      %358 = vmatprep.subr.mxu0 0.0
      %359 = vmatpush2.msra.mxu0 0.0
      %360 = vmatprep.mubr.f32.mxu0 0.0
      %361 = vmatmul.mubr.f32.gmra.mxu0 %v201
      %v362 = vpop.f32.mrf.mxu0
      %v363 = vadd.f32 0.0, %v362
      %v364 = vpop.f32.mrf.mxu0
      %365 = vmatprep.mubr.f32.mxu0 0.0
      %366 = vmatmul.mubr.f32.gmra.mxu0 %v204
      %v367 = vpop.f32.mrf.mxu0
      %v368 = vadd.f32 0.0, %v367
      %v369 = vpop.f32.mrf.mxu0
      %370 = vmatprep.mubr.f32.mxu0 0.0
      %371 = vmatmul.mubr.f32.gmra.mxu0 %v207
      %v372 = vpop.f32.mrf.mxu0
      %v373 = vadd.f32 0.0, %v372
      %v374 = vpop.f32.mrf.mxu0
      %375 = vmatprep.mubr.f32.mxu0 0.0
      %376 = vmatmul.mubr.f32.gmra.mxu0 %v210
      %v377 = vpop.f32.mrf.mxu0
      %v378 = vadd.f32 0.0, %v377
      %v379 = vpop.f32.mrf.mxu0
      %380 = vmatprep.mubr.f32.mxu0 0.0
      %381 = vmatmul.mubr.f32.gmra.mxu0 %v213
      %v382 = vpop.f32.mrf.mxu0
      %v383 = vadd.f32 0.0, %v382
      %v384 = vpop.f32.mrf.mxu0
      %385 = vmatprep.mubr.f32.mxu0 0.0
      %386 = vmatmul.mubr.f32.gmra.mxu0 %v216
      %v387 = vpop.f32.mrf.mxu0
      %v388 = vadd.f32 0.0, %v387
      %v389 = vpop.f32.mrf.mxu0
      %390 = vmatprep.mubr.f32.mxu0 0.0
      %391 = vmatmul.mubr.f32.gmra.mxu0 %v219
      %v392 = vpop.f32.mrf.mxu0
      %v393 = vadd.f32 0.0, %v392
      %v394 = vpop.f32.mrf.mxu0
      %395 = vmatprep.mubr.f32.mxu0 0.0
      %396 = vmatmul.mubr.f32.gmra.mxu0 %v222
      %v397 = vpop.f32.mrf.mxu0
      %v398 = vadd.f32 0.0, %v397
      %v399 = vpop.f32.mrf.mxu0
      %400 = vmatprep.mubr.f32.mxu0 0.0
      %401 = vmatmul.mubr.f32.gmra.mxu0 %v225
      %v402 = vpop.f32.mrf.mxu0
      %v403 = vadd.f32 0.0, %v402
      %v404 = vpop.f32.mrf.mxu0
      %405 = vmatprep.mubr.f32.mxu0 0.0
      %406 = vmatmul.mubr.f32.gmra.mxu0 %v228
      %v407 = vpop.f32.mrf.mxu0
      %v408 = vadd.f32 0.0, %v407
      %v409 = vpop.f32.mrf.mxu0
      %410 = vmatprep.mubr.f32.mxu0 0.0
      %411 = vmatmul.mubr.f32.gmra.mxu0 %v231
      %v412 = vpop.f32.mrf.mxu0
      %v413 = vadd.f32 0.0, %v412
      %v414 = vpop.f32.mrf.mxu0
      %415 = vmatprep.mubr.f32.mxu0 0.0
      %416 = vmatmul.mubr.f32.gmra.mxu0 %v234
      %v417 = vpop.f32.mrf.mxu0
      %v418 = vadd.f32 0.0, %v417
      %v419 = vpop.f32.mrf.mxu0
      %420 = vmatprep.mubr.f32.mxu0 0.0
      %421 = vmatmul.mubr.f32.gmra.mxu0 %v237
      %v422 = vpop.f32.mrf.mxu0
      %v423 = vadd.f32 0.0, %v422
      %v424 = vpop.f32.mrf.mxu0
      %425 = vmatprep.mubr.f32.mxu0 0.0
      %426 = vmatmul.mubr.f32.gmra.mxu0 %v240
      %v427 = vpop.f32.mrf.mxu0
      %v428 = vadd.f32 0.0, %v427
      %v429 = vpop.f32.mrf.mxu0
      %430 = vmatprep.mubr.f32.mxu0 0.0
      %431 = vmatmul.mubr.f32.gmra.mxu0 %v243
      %v432 = vpop.f32.mrf.mxu0
      %v433 = vadd.f32 0.0, %v432
      %v434 = vpop.f32.mrf.mxu0
      %435 = vmatprep.mubr.f32.mxu0 0.0
      %436 = vmatmul.mubr.f32.gmra.mxu0 %v246
      %v437 = vpop.f32.mrf.mxu0
      %v438 = vadd.f32 0.0, %v437
      %v439 = vpop.f32.mrf.mxu0
      %440 = vmatprep.mubr.f32.mxu0 0.0
      %441 = vmatmul.mubr.f32.gmra.mxu0 %v249
      %v442 = vpop.f32.mrf.mxu0
      %v443 = vadd.f32 0.0, %v442
      %v444 = vpop.f32.mrf.mxu0
      %445 = vmatprep.mubr.f32.mxu0 0.0
      %446 = vmatmul.mubr.f32.gmra.mxu0 %v252
      %v447 = vpop.f32.mrf.mxu0
      %v448 = vadd.f32 0.0, %v447
      %v449 = vpop.f32.mrf.mxu0
      %450 = vmatprep.mubr.f32.mxu0 0.0
      %451 = vmatmul.mubr.f32.gmra.mxu0 %v255
      %v452 = vpop.f32.mrf.mxu0
      %v453 = vadd.f32 0.0, %v452
      %v454 = vpop.f32.mrf.mxu0
      %455 = vmatprep.mubr.f32.mxu0 0.0
      %456 = vmatmul.mubr.f32.gmra.mxu0 %v258
      %v457 = vpop.f32.mrf.mxu0
      %v458 = vadd.f32 0.0, %v457
      %v459 = vpop.f32.mrf.mxu0
      %460 = vmatprep.mubr.f32.mxu0 0.0
      %461 = vmatmul.mubr.f32.gmra.mxu0 %v261
      %v462 = vpop.f32.mrf.mxu0
      %v463 = vadd.f32 0.0, %v462
      %v464 = vpop.f32.mrf.mxu0
      %465 = vmatprep.mubr.f32.mxu0 0.0
      %466 = vmatmul.mubr.f32.gmra.mxu0 %v264
      %v467 = vpop.f32.mrf.mxu0
      %v468 = vadd.f32 0.0, %v467
      %v469 = vpop.f32.mrf.mxu0
      %470 = vmatprep.mubr.f32.mxu0 0.0
      %471 = vmatmul.mubr.f32.gmra.mxu0 %v267
      %v472 = vpop.f32.mrf.mxu0
      %v473 = vadd.f32 0.0, %v472
      %v474 = vpop.f32.mrf.mxu0
      %475 = vmatprep.mubr.f32.mxu0 0.0
      %476 = vmatmul.mubr.f32.gmra.mxu0 %v270
      %v477 = vpop.f32.mrf.mxu0
      %v478 = vadd.f32 0.0, %v477
      %v479 = vpop.f32.mrf.mxu0
      %480 = vmatprep.mubr.f32.mxu0 0.0
      %481 = vmatmul.mubr.f32.gmra.mxu0 %v273
      %v482 = vpop.f32.mrf.mxu0
      %v483 = vadd.f32 0.0, %v482
      %v484 = vpop.f32.mrf.mxu0
      %485 = vmatprep.mubr.f32.mxu0 0.0
      %486 = vmatmul.mubr.f32.gmra.mxu0 %v276
      %v487 = vpop.f32.mrf.mxu0
      %v488 = vadd.f32 0.0, %v487
      %v489 = vpop.f32.mrf.mxu0
      %490 = vmatprep.mubr.f32.mxu0 0.0
      %491 = vmatmul.mubr.f32.gmra.mxu0 %v279
      %v492 = vpop.f32.mrf.mxu0
      %v493 = vadd.f32 0.0, %v492
      %v494 = vpop.f32.mrf.mxu0
      %495 = vmatprep.mubr.f32.mxu0 0.0
      %496 = vmatmul.mubr.f32.gmra.mxu0 %v282
      %v497 = vpop.f32.mrf.mxu0
      %v498 = vadd.f32 0.0, %v497
      %v499 = vpop.f32.mrf.mxu0
      %500 = vmatprep.mubr.f32.mxu0 0.0
      %501 = vmatmul.mubr.f32.gmra.mxu0 %v285
      %v502 = vpop.f32.mrf.mxu0
      %v503 = vadd.f32 0.0, %v502
      %v504 = vpop.f32.mrf.mxu0
      %505 = vmatprep.mubr.f32.mxu0 0.0
      %506 = vmatmul.mubr.f32.gmra.mxu0 %v288
      %v507 = vpop.f32.mrf.mxu0
      %v508 = vadd.f32 0.0, %v507
      %v509 = vpop.f32.mrf.mxu0
      %510 = vmatprep.mubr.f32.mxu0 0.0
      %511 = vmatmul.mubr.f32.gmra.mxu0 %v291
      %v512 = vpop.f32.mrf.mxu0
      %v513 = vadd.f32 0.0, %v512
      %v514 = vpop.f32.mrf.mxu0
      %515 = vmatprep.mubr.f32.mxu0 0.0
      %516 = vmatmul.mubr.f32.gmra.mxu0 %v294
      %v517 = vpop.f32.mrf.mxu0
      %v518 = vadd.f32 0.0, %v517
      %v519 = vpop.f32.mrf.mxu0
      %520 = vdwg.mxu0
      %v521 = vld [vmem:[%s2] sm:$0x1]
      %522 = vmatprep.subr.mxu0 0.0
      %523 = vmatpush1.msra.mxu0 %v438
      %524 = vmatprep.subr.mxu0 0.0
      %525 = vmatpush1.msra.mxu0 %v433
      %526 = vmatprep.subr.mxu0 0.0
      %527 = vmatpush1.msra.mxu0 %v428
      %528 = vmatprep.subr.mxu0 0.0
      %529 = vmatpush1.msra.mxu0 %v423
      %530 = vmatprep.subr.mxu0 0.0
      %531 = vmatpush1.msra.mxu0 %v418
      %532 = vmatprep.subr.mxu0 0.0
      %533 = vmatpush1.msra.mxu0 %v413
      %534 = vmatprep.subr.mxu0 0.0
      %535 = vmatpush1.msra.mxu0 %v408
      %536 = vmatprep.subr.mxu0 0.0
      %537 = vmatpush1.msra.mxu0 %v403
      %538 = vmatprep.subr.mxu0 0.0
      %539 = vmatpush1.msra.mxu0 %v398
      %540 = vmatprep.subr.mxu0 0.0
      %541 = vmatpush1.msra.mxu0 %v393
      %542 = vmatprep.subr.mxu0 0.0
      %543 = vmatpush1.msra.mxu0 %v388
      %544 = vmatprep.subr.mxu0 0.0
      %545 = vmatpush1.msra.mxu0 %v383
      %546 = vmatprep.subr.mxu0 0.0
      %547 = vmatpush1.msra.mxu0 %v378
      %548 = vmatprep.subr.mxu0 0.0
      %549 = vmatpush1.msra.mxu0 %v373
      %550 = vmatprep.subr.mxu0 0.0
      %551 = vmatpush1.msra.mxu0 %v368
      %552 = vmatprep.subr.mxu0 0.0
      %553 = vmatpush1.msra.mxu0 %v363
      %554 = vmatprep.subr.mxu0 0.0
      %555 = vmatpush2.msra.mxu0 %v518
      %556 = vmatprep.subr.mxu0 0.0
      %557 = vmatpush2.msra.mxu0 %v513
      %558 = vmatprep.subr.mxu0 0.0
      %559 = vmatpush2.msra.mxu0 %v508
      %560 = vmatprep.subr.mxu0 0.0
      %561 = vmatpush2.msra.mxu0 %v503
      %562 = vmatprep.subr.mxu0 0.0
      %563 = vmatpush2.msra.mxu0 %v498
      %564 = vmatprep.subr.mxu0 0.0
      %565 = vmatpush2.msra.mxu0 %v493
      %566 = vmatprep.subr.mxu0 0.0
      %567 = vmatpush2.msra.mxu0 %v488
      %568 = vmatprep.subr.mxu0 0.0
      %569 = vmatpush2.msra.mxu0 %v483
      %570 = vmatprep.subr.mxu0 0.0
      %571 = vmatpush2.msra.mxu0 %v478
      %572 = vmatprep.subr.mxu0 0.0
      %573 = vmatpush2.msra.mxu0 %v473
      %574 = vmatprep.subr.mxu0 0.0
      %575 = vmatpush2.msra.mxu0 %v468
      %576 = vmatprep.subr.mxu0 0.0
      %577 = vmatpush2.msra.mxu0 %v463
      %578 = vmatprep.subr.mxu0 0.0
      %579 = vmatpush2.msra.mxu0 %v458
      %580 = vmatprep.subr.mxu0 0.0
      %581 = vmatpush2.msra.mxu0 %v453
      %582 = vmatprep.subr.mxu0 0.0
      %583 = vmatpush2.msra.mxu0 %v448
      %584 = vmatprep.subr.mxu0 0.0
      %585 = vmatpush2.msra.mxu0 %v443
      %586 = vmatprep.mubr.f32.mxu0 1.0
      %587 = vmatmul.mubr.f32.gmra.mxu0 1.0
      %v588 = vpop.f32.mrf.mxu0
      %v589 = vadd.f32 0.0, %v588
      %v590 = vpop.f32.mrf.mxu0
      %591 = vdwg.mxu0
      %v592 = vadd.f32 %v521, %v589
      %vm593 = vcmask 122880
      %594 = vst.msk [vmem:[%s2] sm:$0x1] %vm593, %v592
      %v595 = vld [vmem:[%s3] sm:$0x1]
      %v596 = vmul.f32 %v363, %v363
      %v597 = vmul.f32 %v368, %v368
      %v598 = vmul.f32 %v373, %v373
      %v599 = vmul.f32 %v378, %v378
      %v600 = vmul.f32 %v383, %v383
      %v601 = vmul.f32 %v388, %v388
      %v602 = vmul.f32 %v393, %v393
      %v603 = vmul.f32 %v398, %v398
      %v604 = vmul.f32 %v403, %v403
      %v605 = vmul.f32 %v408, %v408
      %v606 = vmul.f32 %v413, %v413
      %v607 = vmul.f32 %v418, %v418
      %v608 = vmul.f32 %v423, %v423
      %v609 = vmul.f32 %v428, %v428
      %v610 = vmul.f32 %v433, %v433
      %v611 = vmul.f32 %v438, %v438
      %v612 = vmul.f32 %v443, %v443
      %v613 = vmul.f32 %v448, %v448
      %v614 = vmul.f32 %v453, %v453
      %v615 = vmul.f32 %v458, %v458
      %v616 = vmul.f32 %v463, %v463
      %v617 = vmul.f32 %v468, %v468
      %v618 = vmul.f32 %v473, %v473
      %v619 = vmul.f32 %v478, %v478
      %v620 = vmul.f32 %v483, %v483
      %v621 = vmul.f32 %v488, %v488
      %v622 = vmul.f32 %v493, %v493
      %v623 = vmul.f32 %v498, %v498
      %v624 = vmul.f32 %v503, %v503
      %v625 = vmul.f32 %v508, %v508
      %v626 = vmul.f32 %v513, %v513
      %v627 = vmul.f32 %v518, %v518
      %628 = vmatprep.subr.mxu0 0.0
      %629 = vmatpush1.msra.mxu0 %v611
      %630 = vmatprep.subr.mxu0 0.0
      %631 = vmatpush1.msra.mxu0 %v610
      %632 = vmatprep.subr.mxu0 0.0
      %633 = vmatpush1.msra.mxu0 %v609
      %634 = vmatprep.subr.mxu0 0.0
      %635 = vmatpush1.msra.mxu0 %v608
      %636 = vmatprep.subr.mxu0 0.0
      %637 = vmatpush1.msra.mxu0 %v607
      %638 = vmatprep.subr.mxu0 0.0
      %639 = vmatpush1.msra.mxu0 %v606
      %640 = vmatprep.subr.mxu0 0.0
      %641 = vmatpush1.msra.mxu0 %v605
      %642 = vmatprep.subr.mxu0 0.0
      %643 = vmatpush1.msra.mxu0 %v604
      %644 = vmatprep.subr.mxu0 0.0
      %645 = vmatpush1.msra.mxu0 %v603
      %646 = vmatprep.subr.mxu0 0.0
      %647 = vmatpush1.msra.mxu0 %v602
      %648 = vmatprep.subr.mxu0 0.0
      %649 = vmatpush1.msra.mxu0 %v601
      %650 = vmatprep.subr.mxu0 0.0
      %651 = vmatpush1.msra.mxu0 %v600
      %652 = vmatprep.subr.mxu0 0.0
      %653 = vmatpush1.msra.mxu0 %v599
      %654 = vmatprep.subr.mxu0 0.0
      %655 = vmatpush1.msra.mxu0 %v598
      %656 = vmatprep.subr.mxu0 0.0
      %657 = vmatpush1.msra.mxu0 %v597
      %658 = vmatprep.subr.mxu0 0.0
      %659 = vmatpush1.msra.mxu0 %v596
      %660 = vmatprep.subr.mxu0 0.0
      %661 = vmatpush2.msra.mxu0 %v627
      %662 = vmatprep.subr.mxu0 0.0
      %663 = vmatpush2.msra.mxu0 %v626
      %664 = vmatprep.subr.mxu0 0.0
      %665 = vmatpush2.msra.mxu0 %v625
      %666 = vmatprep.subr.mxu0 0.0
      %667 = vmatpush2.msra.mxu0 %v624
      %668 = vmatprep.subr.mxu0 0.0
      %669 = vmatpush2.msra.mxu0 %v623
      %670 = vmatprep.subr.mxu0 0.0
      %671 = vmatpush2.msra.mxu0 %v622
      %672 = vmatprep.subr.mxu0 0.0
      %673 = vmatpush2.msra.mxu0 %v621
      %674 = vmatprep.subr.mxu0 0.0
      %675 = vmatpush2.msra.mxu0 %v620
      %676 = vmatprep.subr.mxu0 0.0
      %677 = vmatpush2.msra.mxu0 %v619
      %678 = vmatprep.subr.mxu0 0.0
      %679 = vmatpush2.msra.mxu0 %v618
      %680 = vmatprep.subr.mxu0 0.0
      %681 = vmatpush2.msra.mxu0 %v617
      %682 = vmatprep.subr.mxu0 0.0
      %683 = vmatpush2.msra.mxu0 %v616
      %684 = vmatprep.subr.mxu0 0.0
      %685 = vmatpush2.msra.mxu0 %v615
      %686 = vmatprep.subr.mxu0 0.0
      %687 = vmatpush2.msra.mxu0 %v614
      %688 = vmatprep.subr.mxu0 0.0
      %689 = vmatpush2.msra.mxu0 %v613
      %690 = vmatprep.subr.mxu0 0.0
      %691 = vmatpush2.msra.mxu0 %v612
      %692 = vmatprep.mubr.f32.mxu0 1.0
      %693 = vmatmul.mubr.f32.gmra.mxu0 1.0
      %v694 = vpop.f32.mrf.mxu0
      %v695 = vadd.f32 0.0, %v694
      %v696 = vpop.f32.mrf.mxu0
      %697 = vdwg.mxu0
      %v698 = vadd.f32 %v595, %v695
      %699 = vst.msk [vmem:[%s3] sm:$0x1] %vm593, %v698
      // Predicated region
      $region33: #{mlp_forward.6} parent=27 // pred_check
        %p700 = pneg %p75
      $region34: #{mlp_forward.6} parent=27 // pred_check_branch
        %702 = sbr.rel (%p700) target = $region36
      $region35: #{mlp_forward.6} parent=27 // pred_region
        _
      $region36: #{mlp_forward.6} parent=27 // pred_fallthru
        _
      // Predicated region
      $region37: #{mlp_forward.6} parent=27 // pred_check
        %p703 = pneg %p96
      $region38: #{mlp_forward.6} parent=27 // pred_check_branch
        %705 = sbr.rel (%p703) target = $region40
      $region39: #{mlp_forward.6} parent=27 // pred_region
        _
      $region40: #{mlp_forward.6} parent=27 // pred_fallthru
        _
      // Predicated region
      $region41: #{mlp_forward.6} parent=27 // pred_check
        %p706 = pneg %p75
      $region42: #{mlp_forward.6} parent=27 // pred_check_branch
        %708 = sbr.rel (%p706) target = $region44
      $region43: #{mlp_forward.6} parent=27 // pred_region
        _
      $region44: #{mlp_forward.6} parent=27 // pred_fallthru
        _
      // Predicated region
      $region45: #{mlp_forward.6} parent=27 // pred_check
        %p709 = pneg %p96
      $region46: #{mlp_forward.6} parent=27 // pred_check_branch
        %711 = sbr.rel (%p709) target = $region48
      $region47: #{mlp_forward.6} parent=27 // pred_region
        _
      $region48: #{mlp_forward.6} parent=27 // pred_fallthru
        _
    $region28: #{mlp_forward.6} parent=5 // pred_fallthru
      _
    %p712 = scmp.le.s32.totalorder 2, %s10
    // Predicated region
    $region49: #{mlp_forward.6} parent=5 // pred_check
      %p713 = pneg %p712
    $region50: #{mlp_forward.6} parent=5 // pred_check_branch
      %715 = sbr.rel (%p713) target = $region52
    $region51: #{mlp_forward.6} parent=5 // pred_region
      %s716 = ssub.s32 %s10, 2
    $region52: #{mlp_forward.6} parent=5 // pred_fallthru
      _
  $region6: #{mlp_forward.6} parent=0 // loop_footer
    %s14 = sadd.s32 1, %s10
  $region7: #{mlp_forward.6} parent=0 // loop_footer_branch
    %9 = sbr.rel target = $region3
  $region8: #{mlp_forward.6} parent=0 // loop_exit
    _

// kernel: mlp_forward.7
$region0: #{mlp_forward.7}
  #allocation0 [shape = 'u32[]', space=smem, size = 0x4, offset = 0x4, fixed_abs, tag = 'smem constant byte address 0x4 - core index']
  #allocation1 [shape = 'u32[144,128]{1,0:T(1,128)}', space=vmem, size = 0x12000, scoped, tag = 'internal scratch']
  %s0 = inlined_call_operand.vmem [shape: f32[512,32], index: 0, kind: input, shape index: {}]
  %s1 = inlined_call_operand.vmem [shape: f32[32,16], index: 1, kind: input, shape index: {}]
  %s2 = inlined_call_operand.vmem [shape: f32[1,16], index: 2, kind: input, shape index: {}]
  %s3 = inlined_call_operand.vmem [shape: f32[512,16], index: 3, kind: output, shape index: {}]
  %s4 = sld [smem:[#allocation0]]
  $region45: #{mlp_forward.7} parent=0
    _
  %s6 = ssub.s32 1, %s4
  %s7 = scalar_select 0, %s6, %s4
  loop: start=0, step=1, limit=4
  $region2: #{mlp_forward.7} parent=0 // loop_pre_header
    _
  $region3: #{mlp_forward.7} parent=0 // loop_header
    %s9 = sphi 0, %s13
    %p10 = scmp.ge.s32.totalorder %s9, 4
    %s19 = sphi 0, %s21
    %s22 = sphi 0, %s19
    %s23 = sphi 0, %s22
    %s39 = sphi 0, %s23
    %s43 = sphi 0, %s43
    %s45 = sphi 0, %s43
    %s46 = sphi 0, %s45
    %s60 = sphi 0, %s46
    %s64 = sphi 0, %s64
    %s66 = sphi 0, %s64
    %s67 = sphi 0, %s66
    %s81 = sphi 0, %s67
    %s87 = sphi 0, %s89
    %s90 = sphi 0, %s87
    %s91 = sphi 0, %s90
    %s107 = sphi 0, %s91
  $region4: #{mlp_forward.7} parent=0 // loop_header_branch
    %12 = sbr.rel (%p10) target = $region8
  $region5: #{mlp_forward.7} parent=0 // loop_body
    %s14 = ssub.s32 %s9, 1
    %s15 = ssub.s32 %s9, 2
    %s16 = sadd.s32 %s9, 1
    %s17 = ssub.s32 %s9, %s16
    %p18 = scmp.eq.s32.totalorder %s17, 0
    %s20 = sadd.s32 %s19, 1
    %s21 = scalar_select %p18, %s19, %s20
    %p24 = pneg %p18
    %p25 = scmp.eq.s32.totalorder %s9, 1
    %p26 = por %p24, %p25
    %p27 = scmp.ne.s32.totalorder %s19, %s22
    %p28 = scmp.eq.s32.totalorder %s9, 0
    %p29 = por %p27, %p28
    %p30 = scmp.ne.s32.totalorder %s19, %s22
    %p31 = scmp.eq.s32.totalorder %s14, 1
    %p32 = por %p30, %p31
    %p33 = scmp.ne.s32.totalorder %s22, %s23
    %p34 = scmp.eq.s32.totalorder %s14, 0
    %p35 = por %p33, %p34
    %p36 = scmp.ne.s32.totalorder %s22, %s23
    %p37 = scmp.eq.s32.totalorder %s15, 1
    %p38 = por %p36, %p37
    %p40 = scmp.ne.s32.totalorder %s23, %s39
    %p41 = scmp.eq.s32.totalorder %s15, 0
    %p42 = por %p40, %p41
    %s44 = sadd.s32 %s43, 1
    %p47 = scmp.eq.s32.totalorder %s9, 1
    %p48 = scmp.ne.s32.totalorder %s43, %s45
    %p49 = scmp.eq.s32.totalorder %s9, 0
    %p50 = por %p48, %p49
    %p51 = scmp.ne.s32.totalorder %s43, %s45
    %p52 = scmp.eq.s32.totalorder %s14, 1
    %p53 = por %p51, %p52
    %p54 = scmp.ne.s32.totalorder %s45, %s46
    %p55 = scmp.eq.s32.totalorder %s14, 0
    %p56 = por %p54, %p55
    %p57 = scmp.ne.s32.totalorder %s45, %s46
    %p58 = scmp.eq.s32.totalorder %s15, 1
    %p59 = por %p57, %p58
    %p61 = scmp.ne.s32.totalorder %s46, %s60
    %p62 = scmp.eq.s32.totalorder %s15, 0
    %p63 = por %p61, %p62
    %s65 = sadd.s32 %s64, 1
    %p68 = scmp.eq.s32.totalorder %s9, 1
    %p69 = scmp.ne.s32.totalorder %s64, %s66
    %p70 = scmp.eq.s32.totalorder %s9, 0
    %p71 = por %p69, %p70
    %p72 = scmp.ne.s32.totalorder %s64, %s66
    %p73 = scmp.eq.s32.totalorder %s14, 1
    %p74 = por %p72, %p73
    %p75 = scmp.ne.s32.totalorder %s66, %s67
    %p76 = scmp.eq.s32.totalorder %s14, 0
    %p77 = por %p75, %p76
    %p78 = scmp.ne.s32.totalorder %s66, %s67
    %p79 = scmp.eq.s32.totalorder %s15, 1
    %p80 = por %p78, %p79
    %p82 = scmp.ne.s32.totalorder %s67, %s81
    %p83 = scmp.eq.s32.totalorder %s15, 0
    %p84 = por %p82, %p83
    %s85 = ssub.s32 %s9, %s16
    %p86 = scmp.eq.s32.totalorder %s85, 0
    %s88 = sadd.s32 %s87, 1
    %s89 = scalar_select %p86, %s87, %s88
    %p92 = pneg %p86
    %p93 = scmp.eq.s32.totalorder %s9, 1
    %p94 = por %p92, %p93
    %p95 = scmp.ne.s32.totalorder %s87, %s90
    %p96 = scmp.eq.s32.totalorder %s9, 0
    %p97 = por %p95, %p96
    %p98 = scmp.ne.s32.totalorder %s87, %s90
    %p99 = scmp.eq.s32.totalorder %s14, 1
    %p100 = por %p98, %p99
    %p101 = scmp.ne.s32.totalorder %s90, %s91
    %p102 = scmp.eq.s32.totalorder %s14, 0
    %p103 = por %p101, %p102
    %p104 = scmp.ne.s32.totalorder %s90, %s91
    %p105 = scmp.eq.s32.totalorder %s15, 1
    %p106 = por %p104, %p105
    %p108 = scmp.ne.s32.totalorder %s91, %s107
    %p109 = scmp.eq.s32.totalorder %s15, 0
    %p110 = por %p108, %p109
    %p111 = scmp.le.s32.totalorder 1, %s9
    %p112 = scmp.lt.s32.totalorder %s9, 3
    %p113 = pnand %p111, %p112
    %p114 = pneg %p113
    // Predicated region
    $region9: #{mlp_forward.7} parent=5 // pred_check
      _
    $region10: #{mlp_forward.7} parent=5 // pred_check_branch
      %116 = sbr.rel (%p113) target = $region12
    $region11: #{mlp_forward.7} parent=5 // pred_region
      %s117 = ssub.s32 %s9, 1
      // Predicated region
      $region13: #{mlp_forward.7} parent=11 // pred_check
        %p118 = pneg %p56
      $region14: #{mlp_forward.7} parent=11 // pred_check_branch
        %120 = sbr.rel (%p118) target = $region16
      $region15: #{mlp_forward.7} parent=11 // pred_region
        _
      $region16: #{mlp_forward.7} parent=11 // pred_fallthru
        _
      // Predicated region
      $region17: #{mlp_forward.7} parent=11 // pred_check
        %p121 = pneg %p77
      $region18: #{mlp_forward.7} parent=11 // pred_check_branch
        %123 = sbr.rel (%p121) target = $region20
      $region19: #{mlp_forward.7} parent=11 // pred_region
        _
      $region20: #{mlp_forward.7} parent=11 // pred_fallthru
        _
    $region12: #{mlp_forward.7} parent=5 // pred_fallthru
      _
    %p124 = scmp.lt.s32.totalorder %s9, 2
    // Predicated region
    $region21: #{mlp_forward.7} parent=5 // pred_check
      %p125 = pneg %p124
    $region22: #{mlp_forward.7} parent=5 // pred_check_branch
      %127 = sbr.rel (%p125) target = $region24
    $region23: #{mlp_forward.7} parent=5 // pred_region
      // Predicated region
      $region25: #{mlp_forward.7} parent=23 // pred_check
        %p128 = pneg %p29
      $region26: #{mlp_forward.7} parent=23 // pred_check_branch
        %130 = sbr.rel (%p128) target = $region28
      $region27: #{mlp_forward.7} parent=23 // pred_region
        %s131 = smul.u32 32, %s9
        %p132 = scmp.lt.s32.totalorder %s131, 63
        %s133 = scalar_select %p132, %s131, 63
        %s134 = smul.addr %s133, 8
        %s135 = scalar_lea.vmem %s0, %s134
        %s136 = smul.u32 32, %s9
      $region28: #{mlp_forward.7} parent=23 // pred_fallthru
        _
    $region24: #{mlp_forward.7} parent=5 // pred_fallthru
      _
    %p137 = scmp.le.s32.totalorder 1, %s9
    %p138 = scmp.lt.s32.totalorder %s9, 3
    %p139 = pnand %p137, %p138
    %p140 = pneg %p139
    // Predicated region
    $region29: #{mlp_forward.7} parent=5 // pred_check
      _
    $region30: #{mlp_forward.7} parent=5 // pred_check_branch
      %142 = sbr.rel (%p139) target = $region32
    $region31: #{mlp_forward.7} parent=5 // pred_region
      %s143 = ssub.s32 %s9, 1
      %s144 = smul.u32 32, %s14
      %p145 = scmp.lt.s32.totalorder %s144, 63
      %s146 = scalar_select %p145, %s144, 63
      %s147 = smul.addr %s146, 8
      %s148 = scalar_lea.vmem %s0, %s147
      %p149 = pneg %p35
      %p150 = pneg %p32
      %p151 = pneg %p56
      %p152 = pneg %p53
      %p153 = pneg %p77
      %p154 = pneg %p74
      %p155 = pneg %p103
      %p156 = pneg %p100
      %s157 = smul.u32 32, %s14
      %p158 = scmp.lt.s32.totalorder %s157, 63
      %s159 = scalar_select %p158, %s157, 63
      %s160 = smul.addr %s159, 8
      %s161 = scalar_lea.vmem %s3, %s160
      %s162 = smul.u32 32, %s14
      %p163 = scmp.lt.s32.totalorder %s162, 63
      %s164 = scalar_select %p163, %s162, 63
      %s165 = smul.addr %s164, 8
      %s166 = scalar_lea.vmem %s0, %s165
      %s167 = smul.u32 32, %s14
      %s168 = smul.u32 32, %s14
      %p169 = scmp.lt.s32.totalorder %s168, 63
      %s170 = scalar_select %p169, %s168, 63
      %s171 = smul.addr %s170, 8
      %s172 = scalar_lea.vmem %s3, %s171
      %s173 = smul.u32 32, %s14
      %v174 = vld [vmem:[%s166] sm:$0xff]
      %v175 = vld [vmem:[%s166 + $0x8] sm:$0xff]
      %v176 = vld [vmem:[%s166 + $0x10] sm:$0xff]
      %v177 = vld [vmem:[%s166 + $0x18] sm:$0xff]
      %v178 = vld [vmem:[%s166 + $0x20] sm:$0xff]
      %v179 = vld [vmem:[%s166 + $0x28] sm:$0xff]
      %v180 = vld [vmem:[%s166 + $0x30] sm:$0xff]
      %v181 = vld [vmem:[%s166 + $0x38] sm:$0xff]
      %v182 = vld [vmem:[%s166 + $0x40] sm:$0xff]
      %v183 = vld [vmem:[%s166 + $0x48] sm:$0xff]
      %v184 = vld [vmem:[%s166 + $0x50] sm:$0xff]
      %v185 = vld [vmem:[%s166 + $0x58] sm:$0xff]
      %v186 = vld [vmem:[%s166 + $0x60] sm:$0xff]
      %v187 = vld [vmem:[%s166 + $0x68] sm:$0xff]
      %v188 = vld [vmem:[%s166 + $0x70] sm:$0xff]
      %v189 = vld [vmem:[%s166 + $0x78] sm:$0xff]
      %v190 = vld [vmem:[%s166 + $0x80] sm:$0xff]
      %v191 = vld [vmem:[%s166 + $0x88] sm:$0xff]
      %v192 = vld [vmem:[%s166 + $0x90] sm:$0xff]
      %v193 = vld [vmem:[%s166 + $0x98] sm:$0xff]
      %v194 = vld [vmem:[%s166 + $0xa0] sm:$0xff]
      %v195 = vld [vmem:[%s166 + $0xa8] sm:$0xff]
      %v196 = vld [vmem:[%s166 + $0xb0] sm:$0xff]
      %v197 = vld [vmem:[%s166 + $0xb8] sm:$0xff]
      %v198 = vld [vmem:[%s166 + $0xc0] sm:$0xff]
      %v199 = vld [vmem:[%s166 + $0xc8] sm:$0xff]
      %v200 = vld [vmem:[%s166 + $0xd0] sm:$0xff]
      %v201 = vld [vmem:[%s166 + $0xd8] sm:$0xff]
      %v202 = vld [vmem:[%s166 + $0xe0] sm:$0xff]
      %v203 = vld [vmem:[%s166 + $0xe8] sm:$0xff]
      %v204 = vld [vmem:[%s166 + $0xf0] sm:$0xff]
      %v205 = vld [vmem:[%s166 + $0xf8] sm:$0xff]
      %v206 = vld [vmem:[%s1] sm:$0xff]
      %v207 = vld [vmem:[%s1 + $0x8] sm:$0xff]
      %v208 = vld [vmem:[%s1 + $0x10] sm:$0xff]
      %v209 = vld [vmem:[%s1 + $0x18] sm:$0xff]
      %v210 = vld [vmem:[%s2] sm:$0x1]
      %v212 = vlaneseq
      %v213 = vshrl.u32 %v212, 7
      %v214 = vsub.s32 0, %v213
      %v215 = vrot.slane %v210, %v214
      %vm217 = vcmask 261120
      %v219 = vsel %vm217, %v174, 0
      %v222 = vsel %vm217, %v175, 0
      %v225 = vsel %vm217, %v176, 0
      %v228 = vsel %vm217, %v177, 0
      %v231 = vsel %vm217, %v178, 0
      %v234 = vsel %vm217, %v179, 0
      %v237 = vsel %vm217, %v180, 0
      %v240 = vsel %vm217, %v181, 0
      %v243 = vsel %vm217, %v182, 0
      %v246 = vsel %vm217, %v183, 0
      %v249 = vsel %vm217, %v184, 0
      %v252 = vsel %vm217, %v185, 0
      %v255 = vsel %vm217, %v186, 0
      %v258 = vsel %vm217, %v187, 0
      %v261 = vsel %vm217, %v188, 0
      %v264 = vsel %vm217, %v189, 0
      %v267 = vsel %vm217, %v190, 0
      %v270 = vsel %vm217, %v191, 0
      %v273 = vsel %vm217, %v192, 0
      %v276 = vsel %vm217, %v193, 0
      %v279 = vsel %vm217, %v194, 0
      %v282 = vsel %vm217, %v195, 0
      %v285 = vsel %vm217, %v196, 0
      %v288 = vsel %vm217, %v197, 0
      %v291 = vsel %vm217, %v198, 0
      %v294 = vsel %vm217, %v199, 0
      %v297 = vsel %vm217, %v200, 0
      %v300 = vsel %vm217, %v201, 0
      %v303 = vsel %vm217, %v202, 0
      %v306 = vsel %vm217, %v203, 0
      %v309 = vsel %vm217, %v204, 0
      %v312 = vsel %vm217, %v205, 0
      %314 = vmatprep.subr.mxu0 0.0
      %315 = vmatpush1.msra.mxu0 0.0
      %316 = vmatprep.subr.mxu0 0.0
      %317 = vmatpush1.msra.mxu0 0.0
      %318 = vmatprep.subr.mxu0 0.0
      %319 = vmatpush1.msra.mxu0 0.0
      %320 = vmatprep.subr.mxu0 0.0
      %321 = vmatpush1.msra.mxu0 0.0
      %322 = vmatprep.subr.mxu0 0.0
      %323 = vmatpush1.msra.mxu0 0.0
      %324 = vmatprep.subr.mxu0 0.0
      %325 = vmatpush1.msra.mxu0 0.0
      %326 = vmatprep.subr.mxu0 0.0
      %327 = vmatpush1.msra.mxu0 0.0
      %328 = vmatprep.subr.mxu0 0.0
      %329 = vmatpush1.msra.mxu0 0.0
      %330 = vmatprep.subr.mxu0 0.0
      %331 = vmatpush1.msra.mxu0 0.0
      %332 = vmatprep.subr.mxu0 0.0
      %333 = vmatpush1.msra.mxu0 0.0
      %334 = vmatprep.subr.mxu0 0.0
      %335 = vmatpush1.msra.mxu0 0.0
      %336 = vmatprep.subr.mxu0 0.0
      %337 = vmatpush1.msra.mxu0 0.0
      %338 = vmatprep.subr.mxu0 0.0
      %339 = vmatpush1.msra.mxu0 %v209
      %340 = vmatprep.subr.mxu0 0.0
      %341 = vmatpush1.msra.mxu0 %v208
      %342 = vmatprep.subr.mxu0 0.0
      %343 = vmatpush1.msra.mxu0 %v207
      %344 = vmatprep.subr.mxu0 0.0
      %345 = vmatpush1.msra.mxu0 %v206
      %346 = vmatprep.subr.mxu0 0.0
      %347 = vmatpush2.msra.mxu0 0.0
      %348 = vmatprep.subr.mxu0 0.0
      %349 = vmatpush2.msra.mxu0 0.0
      %350 = vmatprep.subr.mxu0 0.0
      %351 = vmatpush2.msra.mxu0 0.0
      %352 = vmatprep.subr.mxu0 0.0
      %353 = vmatpush2.msra.mxu0 0.0
      %354 = vmatprep.subr.mxu0 0.0
      %355 = vmatpush2.msra.mxu0 0.0
      %356 = vmatprep.subr.mxu0 0.0
      %357 = vmatpush2.msra.mxu0 0.0
      %358 = vmatprep.subr.mxu0 0.0
      %359 = vmatpush2.msra.mxu0 0.0
      %360 = vmatprep.subr.mxu0 0.0
      %361 = vmatpush2.msra.mxu0 0.0
      %362 = vmatprep.subr.mxu0 0.0
      %363 = vmatpush2.msra.mxu0 0.0
      %364 = vmatprep.subr.mxu0 0.0
      %365 = vmatpush2.msra.mxu0 0.0
      %366 = vmatprep.subr.mxu0 0.0
      %367 = vmatpush2.msra.mxu0 0.0
      %368 = vmatprep.subr.mxu0 0.0
      %369 = vmatpush2.msra.mxu0 0.0
      %370 = vmatprep.subr.mxu0 0.0
      %371 = vmatpush2.msra.mxu0 0.0
      %372 = vmatprep.subr.mxu0 0.0
      %373 = vmatpush2.msra.mxu0 0.0
      %374 = vmatprep.subr.mxu0 0.0
      %375 = vmatpush2.msra.mxu0 0.0
      %376 = vmatprep.subr.mxu0 0.0
      %377 = vmatpush2.msra.mxu0 0.0
      %378 = vmatprep.mubr.f32.mxu0 0.0
      %379 = vmatmul.mubr.f32.gmra.mxu0 %v219
      %v380 = vpop.f32.mrf.mxu0
      %v381 = vadd.f32 %v215, %v380
      %v382 = vpop.f32.mrf.mxu0
      %383 = vmatprep.mubr.f32.mxu0 0.0
      %384 = vmatmul.mubr.f32.gmra.mxu0 %v222
      %v385 = vpop.f32.mrf.mxu0
      %v386 = vadd.f32 %v215, %v385
      %v387 = vpop.f32.mrf.mxu0
      %388 = vmatprep.mubr.f32.mxu0 0.0
      %389 = vmatmul.mubr.f32.gmra.mxu0 %v225
      %v390 = vpop.f32.mrf.mxu0
      %v391 = vadd.f32 %v215, %v390
      %v392 = vpop.f32.mrf.mxu0
      %393 = vmatprep.mubr.f32.mxu0 0.0
      %394 = vmatmul.mubr.f32.gmra.mxu0 %v228
      %v395 = vpop.f32.mrf.mxu0
      %v396 = vadd.f32 %v215, %v395
      %v397 = vpop.f32.mrf.mxu0
      %398 = vmatprep.mubr.f32.mxu0 0.0
      %399 = vmatmul.mubr.f32.gmra.mxu0 %v231
      %v400 = vpop.f32.mrf.mxu0
      %v401 = vadd.f32 %v215, %v400
      %v402 = vpop.f32.mrf.mxu0
      %403 = vmatprep.mubr.f32.mxu0 0.0
      %404 = vmatmul.mubr.f32.gmra.mxu0 %v234
      %v405 = vpop.f32.mrf.mxu0
      %v406 = vadd.f32 %v215, %v405
      %v407 = vpop.f32.mrf.mxu0
      %408 = vmatprep.mubr.f32.mxu0 0.0
      %409 = vmatmul.mubr.f32.gmra.mxu0 %v237
      %v410 = vpop.f32.mrf.mxu0
      %v411 = vadd.f32 %v215, %v410
      %v412 = vpop.f32.mrf.mxu0
      %413 = vmatprep.mubr.f32.mxu0 0.0
      %414 = vmatmul.mubr.f32.gmra.mxu0 %v240
      %v415 = vpop.f32.mrf.mxu0
      %v416 = vadd.f32 %v215, %v415
      %v417 = vpop.f32.mrf.mxu0
      %418 = vmatprep.mubr.f32.mxu0 0.0
      %419 = vmatmul.mubr.f32.gmra.mxu0 %v243
      %v420 = vpop.f32.mrf.mxu0
      %v421 = vadd.f32 %v215, %v420
      %v422 = vpop.f32.mrf.mxu0
      %423 = vmatprep.mubr.f32.mxu0 0.0
      %424 = vmatmul.mubr.f32.gmra.mxu0 %v246
      %v425 = vpop.f32.mrf.mxu0
      %v426 = vadd.f32 %v215, %v425
      %v427 = vpop.f32.mrf.mxu0
      %428 = vmatprep.mubr.f32.mxu0 0.0
      %429 = vmatmul.mubr.f32.gmra.mxu0 %v249
      %v430 = vpop.f32.mrf.mxu0
      %v431 = vadd.f32 %v215, %v430
      %v432 = vpop.f32.mrf.mxu0
      %433 = vmatprep.mubr.f32.mxu0 0.0
      %434 = vmatmul.mubr.f32.gmra.mxu0 %v252
      %v435 = vpop.f32.mrf.mxu0
      %v436 = vadd.f32 %v215, %v435
      %v437 = vpop.f32.mrf.mxu0
      %438 = vmatprep.mubr.f32.mxu0 0.0
      %439 = vmatmul.mubr.f32.gmra.mxu0 %v255
      %v440 = vpop.f32.mrf.mxu0
      %v441 = vadd.f32 %v215, %v440
      %v442 = vpop.f32.mrf.mxu0
      %443 = vmatprep.mubr.f32.mxu0 0.0
      %444 = vmatmul.mubr.f32.gmra.mxu0 %v258
      %v445 = vpop.f32.mrf.mxu0
      %v446 = vadd.f32 %v215, %v445
      %v447 = vpop.f32.mrf.mxu0
      %448 = vmatprep.mubr.f32.mxu0 0.0
      %449 = vmatmul.mubr.f32.gmra.mxu0 %v261
      %v450 = vpop.f32.mrf.mxu0
      %v451 = vadd.f32 %v215, %v450
      %v452 = vpop.f32.mrf.mxu0
      %453 = vmatprep.mubr.f32.mxu0 0.0
      %454 = vmatmul.mubr.f32.gmra.mxu0 %v264
      %v455 = vpop.f32.mrf.mxu0
      %v456 = vadd.f32 %v215, %v455
      %v457 = vpop.f32.mrf.mxu0
      %458 = vmatprep.mubr.f32.mxu0 0.0
      %459 = vmatmul.mubr.f32.gmra.mxu0 %v267
      %v460 = vpop.f32.mrf.mxu0
      %v461 = vadd.f32 %v215, %v460
      %v462 = vpop.f32.mrf.mxu0
      %463 = vmatprep.mubr.f32.mxu0 0.0
      %464 = vmatmul.mubr.f32.gmra.mxu0 %v270
      %v465 = vpop.f32.mrf.mxu0
      %v466 = vadd.f32 %v215, %v465
      %v467 = vpop.f32.mrf.mxu0
      %468 = vmatprep.mubr.f32.mxu0 0.0
      %469 = vmatmul.mubr.f32.gmra.mxu0 %v273
      %v470 = vpop.f32.mrf.mxu0
      %v471 = vadd.f32 %v215, %v470
      %v472 = vpop.f32.mrf.mxu0
      %473 = vmatprep.mubr.f32.mxu0 0.0
      %474 = vmatmul.mubr.f32.gmra.mxu0 %v276
      %v475 = vpop.f32.mrf.mxu0
      %v476 = vadd.f32 %v215, %v475
      %v477 = vpop.f32.mrf.mxu0
      %478 = vmatprep.mubr.f32.mxu0 0.0
      %479 = vmatmul.mubr.f32.gmra.mxu0 %v279
      %v480 = vpop.f32.mrf.mxu0
      %v481 = vadd.f32 %v215, %v480
      %v482 = vpop.f32.mrf.mxu0
      %483 = vmatprep.mubr.f32.mxu0 0.0
      %484 = vmatmul.mubr.f32.gmra.mxu0 %v282
      %v485 = vpop.f32.mrf.mxu0
      %v486 = vadd.f32 %v215, %v485
      %v487 = vpop.f32.mrf.mxu0
      %488 = vmatprep.mubr.f32.mxu0 0.0
      %489 = vmatmul.mubr.f32.gmra.mxu0 %v285
      %v490 = vpop.f32.mrf.mxu0
      %v491 = vadd.f32 %v215, %v490
      %v492 = vpop.f32.mrf.mxu0
      %493 = vmatprep.mubr.f32.mxu0 0.0
      %494 = vmatmul.mubr.f32.gmra.mxu0 %v288
      %v495 = vpop.f32.mrf.mxu0
      %v496 = vadd.f32 %v215, %v495
      %v497 = vpop.f32.mrf.mxu0
      %498 = vmatprep.mubr.f32.mxu0 0.0
      %499 = vmatmul.mubr.f32.gmra.mxu0 %v291
      %v500 = vpop.f32.mrf.mxu0
      %v501 = vadd.f32 %v215, %v500
      %v502 = vpop.f32.mrf.mxu0
      %503 = vmatprep.mubr.f32.mxu0 0.0
      %504 = vmatmul.mubr.f32.gmra.mxu0 %v294
      %v505 = vpop.f32.mrf.mxu0
      %v506 = vadd.f32 %v215, %v505
      %v507 = vpop.f32.mrf.mxu0
      %508 = vmatprep.mubr.f32.mxu0 0.0
      %509 = vmatmul.mubr.f32.gmra.mxu0 %v297
      %v510 = vpop.f32.mrf.mxu0
      %v511 = vadd.f32 %v215, %v510
      %v512 = vpop.f32.mrf.mxu0
      %513 = vmatprep.mubr.f32.mxu0 0.0
      %514 = vmatmul.mubr.f32.gmra.mxu0 %v300
      %v515 = vpop.f32.mrf.mxu0
      %v516 = vadd.f32 %v215, %v515
      %v517 = vpop.f32.mrf.mxu0
      %518 = vmatprep.mubr.f32.mxu0 0.0
      %519 = vmatmul.mubr.f32.gmra.mxu0 %v303
      %v520 = vpop.f32.mrf.mxu0
      %v521 = vadd.f32 %v215, %v520
      %v522 = vpop.f32.mrf.mxu0
      %523 = vmatprep.mubr.f32.mxu0 0.0
      %524 = vmatmul.mubr.f32.gmra.mxu0 %v306
      %v525 = vpop.f32.mrf.mxu0
      %v526 = vadd.f32 %v215, %v525
      %v527 = vpop.f32.mrf.mxu0
      %528 = vmatprep.mubr.f32.mxu0 0.0
      %529 = vmatmul.mubr.f32.gmra.mxu0 %v309
      %v530 = vpop.f32.mrf.mxu0
      %v531 = vadd.f32 %v215, %v530
      %v532 = vpop.f32.mrf.mxu0
      %533 = vmatprep.mubr.f32.mxu0 0.0
      %534 = vmatmul.mubr.f32.gmra.mxu0 %v312
      %v535 = vpop.f32.mrf.mxu0
      %v536 = vadd.f32 %v215, %v535
      %v537 = vpop.f32.mrf.mxu0
      %538 = vdwg.mxu0
      %v539 = vmax.f32 %v381, 0.0
      %v540 = vmax.f32 %v386, 0.0
      %v541 = vmax.f32 %v391, 0.0
      %v542 = vmax.f32 %v396, 0.0
      %v543 = vmax.f32 %v401, 0.0
      %v544 = vmax.f32 %v406, 0.0
      %v545 = vmax.f32 %v411, 0.0
      %v546 = vmax.f32 %v416, 0.0
      %v547 = vmax.f32 %v421, 0.0
      %v548 = vmax.f32 %v426, 0.0
      %v549 = vmax.f32 %v431, 0.0
      %v550 = vmax.f32 %v436, 0.0
      %v551 = vmax.f32 %v441, 0.0
      %v552 = vmax.f32 %v446, 0.0
      %v553 = vmax.f32 %v451, 0.0
      %v554 = vmax.f32 %v456, 0.0
      %v555 = vmax.f32 %v461, 0.0
      %v556 = vmax.f32 %v466, 0.0
      %v557 = vmax.f32 %v471, 0.0
      %v558 = vmax.f32 %v476, 0.0
      %v559 = vmax.f32 %v481, 0.0
      %v560 = vmax.f32 %v486, 0.0
      %v561 = vmax.f32 %v491, 0.0
      %v562 = vmax.f32 %v496, 0.0
      %v563 = vmax.f32 %v501, 0.0
      %v564 = vmax.f32 %v506, 0.0
      %v565 = vmax.f32 %v511, 0.0
      %v566 = vmax.f32 %v516, 0.0
      %v567 = vmax.f32 %v521, 0.0
      %v568 = vmax.f32 %v526, 0.0
      %v569 = vmax.f32 %v531, 0.0
      %v570 = vmax.f32 %v536, 0.0
      %vm571 = vcmask 130048
      %572 = vst.msk [vmem:[%s172] sm:$0xff] %vm571, %v539
      %573 = vst.msk [vmem:[%s172 + $0x8] sm:$0xff] %vm571, %v540
      %574 = vst.msk [vmem:[%s172 + $0x10] sm:$0xff] %vm571, %v541
      %575 = vst.msk [vmem:[%s172 + $0x18] sm:$0xff] %vm571, %v542
      %576 = vst.msk [vmem:[%s172 + $0x20] sm:$0xff] %vm571, %v543
      %577 = vst.msk [vmem:[%s172 + $0x28] sm:$0xff] %vm571, %v544
      %578 = vst.msk [vmem:[%s172 + $0x30] sm:$0xff] %vm571, %v545
      %579 = vst.msk [vmem:[%s172 + $0x38] sm:$0xff] %vm571, %v546
      %580 = vst.msk [vmem:[%s172 + $0x40] sm:$0xff] %vm571, %v547
      %581 = vst.msk [vmem:[%s172 + $0x48] sm:$0xff] %vm571, %v548
      %582 = vst.msk [vmem:[%s172 + $0x50] sm:$0xff] %vm571, %v549
      %583 = vst.msk [vmem:[%s172 + $0x58] sm:$0xff] %vm571, %v550
      %584 = vst.msk [vmem:[%s172 + $0x60] sm:$0xff] %vm571, %v551
      %585 = vst.msk [vmem:[%s172 + $0x68] sm:$0xff] %vm571, %v552
      %586 = vst.msk [vmem:[%s172 + $0x70] sm:$0xff] %vm571, %v553
      %587 = vst.msk [vmem:[%s172 + $0x78] sm:$0xff] %vm571, %v554
      %588 = vst.msk [vmem:[%s172 + $0x80] sm:$0xff] %vm571, %v555
      %589 = vst.msk [vmem:[%s172 + $0x88] sm:$0xff] %vm571, %v556
      %590 = vst.msk [vmem:[%s172 + $0x90] sm:$0xff] %vm571, %v557
      %591 = vst.msk [vmem:[%s172 + $0x98] sm:$0xff] %vm571, %v558
      %592 = vst.msk [vmem:[%s172 + $0xa0] sm:$0xff] %vm571, %v559
      %593 = vst.msk [vmem:[%s172 + $0xa8] sm:$0xff] %vm571, %v560
      %594 = vst.msk [vmem:[%s172 + $0xb0] sm:$0xff] %vm571, %v561
      %595 = vst.msk [vmem:[%s172 + $0xb8] sm:$0xff] %vm571, %v562
      %596 = vst.msk [vmem:[%s172 + $0xc0] sm:$0xff] %vm571, %v563
      %597 = vst.msk [vmem:[%s172 + $0xc8] sm:$0xff] %vm571, %v564
      %598 = vst.msk [vmem:[%s172 + $0xd0] sm:$0xff] %vm571, %v565
      %599 = vst.msk [vmem:[%s172 + $0xd8] sm:$0xff] %vm571, %v566
      %600 = vst.msk [vmem:[%s172 + $0xe0] sm:$0xff] %vm571, %v567
      %601 = vst.msk [vmem:[%s172 + $0xe8] sm:$0xff] %vm571, %v568
      %602 = vst.msk [vmem:[%s172 + $0xf0] sm:$0xff] %vm571, %v569
      %603 = vst.msk [vmem:[%s172 + $0xf8] sm:$0xff] %vm571, %v570
      %s604 = smul.u32 32, %s14
      %p605 = scmp.lt.s32.totalorder %s604, 63
      %s606 = scalar_select %p605, %s604, 63
      %s607 = smul.addr %s606, 8
      %s608 = scalar_lea.vmem %s3, %s607
      // Predicated region
      $region33: #{mlp_forward.7} parent=31 // pred_check
        %p609 = pneg %p100
      $region34: #{mlp_forward.7} parent=31 // pred_check_branch
        %611 = sbr.rel (%p609) target = $region36
      $region35: #{mlp_forward.7} parent=31 // pred_region
        %s612 = smul.u32 32, %s14
      $region36: #{mlp_forward.7} parent=31 // pred_fallthru
        _
    $region32: #{mlp_forward.7} parent=5 // pred_fallthru
      _
    %p613 = scmp.le.s32.totalorder 2, %s9
    // Predicated region
    $region37: #{mlp_forward.7} parent=5 // pred_check
      %p614 = pneg %p613
    $region38: #{mlp_forward.7} parent=5 // pred_check_branch
      %616 = sbr.rel (%p614) target = $region40
    $region39: #{mlp_forward.7} parent=5 // pred_region
      %s617 = ssub.s32 %s9, 2
      // Predicated region
      $region41: #{mlp_forward.7} parent=39 // pred_check
        %p618 = pneg %p106
      $region42: #{mlp_forward.7} parent=39 // pred_check_branch
        %620 = sbr.rel (%p618) target = $region44
      $region43: #{mlp_forward.7} parent=39 // pred_region
        %s621 = smul.u32 32, %s15
        %p622 = scmp.lt.s32.totalorder %s621, 63
        %s623 = scalar_select %p622, %s621, 63
        %s624 = smul.addr %s623, 8
        %s625 = scalar_lea.vmem %s3, %s624
      $region44: #{mlp_forward.7} parent=39 // pred_fallthru
        _
    $region40: #{mlp_forward.7} parent=5 // pred_fallthru
      _
  $region6: #{mlp_forward.7} parent=0 // loop_footer
    %s13 = sadd.s32 1, %s9
  $region7: #{mlp_forward.7} parent=0 // loop_footer_branch
    %8 = sbr.rel target = $region3
  $region8: #{mlp_forward.7} parent=0 // loop_exit
    _

</llo_original>
